<compile_context>
chip_gen: v7x
topology: tpu7x:2x2x1
jax: 0.10.0
libtpu: 0.0.40
codegen_flags: <defaults>
</compile_context>

<pallas_src>
import jax
import jax.numpy as jnp
from jax.experimental import pallas as pl
from jax.experimental.pallas import tpu as pltpu

Z_DIM = 32              # z_dim global from the reference file (small & lane-friendly)
H1, H2, OUT = 512, 256, 1
OUT_PAD = 128           # lane-dense padded width of the final layer


def _round_up(x, m):
    return ((x + m - 1) // m) * m


def _leaky_relu(x, slope=0.2):
    return jnp.where(x > 0, x, slope * x)


def discriminator_kernel(z_ref, w1_ref, b1_ref, w2_ref, b2_ref, w3_ref, b3_ref,
                         out_ref):
    # Layer 1: (TB, z_dim) @ (z_dim, 512) + (1, 512); bf16 MXU inputs, f32 acc.
    h = jnp.dot(z_ref[...].astype(jnp.bfloat16), w1_ref[...],
                preferred_element_type=jnp.float32)
    h = _leaky_relu(h + b1_ref[...])
    # Layer 2: (TB, 512) @ (512, 256) + (1, 256)
    h = jnp.dot(h.astype(jnp.bfloat16), w2_ref[...],
                preferred_element_type=jnp.float32)
    h = _leaky_relu(h + b2_ref[...])
    # Layer 3: (TB, 256) @ (256, 128) + (1, 128); lane-padded, column 0 is real.
    logit = jnp.dot(h.astype(jnp.bfloat16), w3_ref[...],
                    preferred_element_type=jnp.float32)
    logit = logit + b3_ref[...]
    out_ref[...] = jax.nn.sigmoid(logit).astype(out_ref.dtype)


def discriminator_forward(z, params, *, block_b=1024):
    """z: (B, Z_DIM) f32. Returns (B, 1) f32 validity."""
    w1, b1, w2, b2, w3p, b3p = params
    B = z.shape[0]

    # Batch tile: multiple of 128, capped at block_b (VMEM-safe on v5e/v6e/v7x).
    tb = min(block_b, _round_up(B, 128))
    Bp = _round_up(B, tb)
    if Bp != B:
        z = jnp.pad(z, ((0, Bp - B), (0, 0)))
    grid = (Bp // tb,)

    const2d = lambda shape: pl.BlockSpec(shape, lambda i: (0, 0))

    flops = 2 * Bp * (Z_DIM * H1 + H1 * H2 + H2 * OUT_PAD)
    bytes_accessed = (z.size * 4
                      + w1.size * 2 + w2.size * 2 + w3p.size * 2
                      + (b1.size + b2.size + b3p.size) * 4
                      + Bp * OUT_PAD * 4)
    cost = pl.CostEstimate(flops=flops,
                           transcendentals=Bp * OUT_PAD,
                           bytes_accessed=bytes_accessed)

    out_padded = pl.pallas_call(
        discriminator_kernel,
        out_shape=jax.ShapeDtypeStruct((Bp, OUT_PAD), jnp.float32),
        grid=grid,
        in_specs=[
            pl.BlockSpec((tb, Z_DIM), lambda i: (i, 0)),   # z: tiled over batch
            const2d(w1.shape), const2d(b1.shape),          # weights: resident
            const2d(w2.shape), const2d(b2.shape),
            const2d(w3p.shape), const2d(b3p.shape),
        ],
        out_specs=pl.BlockSpec((tb, OUT_PAD), lambda i: (i, 0)),
        compiler_params=pltpu.CompilerParams(
            dimension_semantics=("parallel",)),
        cost_estimate=cost,
    )(z, w1, b1, w2, b2, w3p, b3p)

    return out_padded[:B, :OUT]


def init_params(key):
    """Deterministic synthetic init (Kaiming-ish). Weights are (in, out), bf16;
    biases f32. Layer-3 weight/bias are lane-padded to OUT_PAD columns."""
    k1, k2, k3 = jax.random.split(key, 3)
    w1 = (jax.random.normal(k1, (Z_DIM, H1), jnp.float32)
          * (1.0 / jnp.sqrt(Z_DIM))).astype(jnp.bfloat16)
    b1 = jnp.zeros((1, H1), jnp.float32)
    w2 = (jax.random.normal(k2, (H1, H2), jnp.float32)
          * (1.0 / jnp.sqrt(H1))).astype(jnp.bfloat16)
    b2 = jnp.zeros((1, H2), jnp.float32)
    w3 = (jax.random.normal(k3, (H2, OUT), jnp.float32)
          * (1.0 / jnp.sqrt(H2))).astype(jnp.bfloat16)
    b3 = jnp.zeros((1, OUT), jnp.float32)
    # Lane-pad the final layer so the kernel's output store is lane-dense.
    w3p = jnp.zeros((H2, OUT_PAD), jnp.bfloat16).at[:, :OUT].set(w3)
    b3p = jnp.zeros((1, OUT_PAD), jnp.float32).at[:, :OUT].set(b3)
    return (w1, b1, w2, b2, w3p, b3p)


def reference_forward(z, params):
    """Pure-JAX reference matching the kernel math (bf16 dots, f32 accumulate)."""
    w1, b1, w2, b2, w3p, b3p = params
    h = jnp.dot(z.astype(jnp.bfloat16), w1, preferred_element_type=jnp.float32)
    h = _leaky_relu(h + b1)
    h = jnp.dot(h.astype(jnp.bfloat16), w2, preferred_element_type=jnp.float32)
    h = _leaky_relu(h + b2)
    logit = jnp.dot(h.astype(jnp.bfloat16), w3p[:, :OUT],
                    preferred_element_type=jnp.float32) + b3p[:, :OUT]
    return jax.nn.sigmoid(logit)


if __name__ == "__main__":
    key = jax.random.PRNGKey(0)
    k_params, k_z = jax.random.split(key)
    params = init_params(k_params)

    B = 8
    z = jax.random.normal(k_z, (B, Z_DIM), jnp.float32)

    out = discriminator_forward(z, params)
    out = jax.block_until_ready(out)

    ref = reference_forward(z, params)
    assert out.shape == (B, OUT), out.shape
    assert jnp.allclose(out, ref, atol=1e-4, rtol=1e-4), "mismatch vs reference"

    print("KERNEL_OK")
</pallas_src>

<mosaic_0001>
module attributes {stable_mosaic.version = 11 : i64} {
  func.func @discriminator_kernel(%arg0: i32, %arg1: memref<128x32xf32, #tpu.memory_space<vmem>>, %arg2: memref<32x512xbf16, #tpu.memory_space<vmem>>, %arg3: memref<1x512xf32, #tpu.memory_space<vmem>>, %arg4: memref<512x256xbf16, #tpu.memory_space<vmem>>, %arg5: memref<1x256xf32, #tpu.memory_space<vmem>>, %arg6: memref<256x128xbf16, #tpu.memory_space<vmem>>, %arg7: memref<1x128xf32, #tpu.memory_space<vmem>>, %arg8: memref<128x128xf32, #tpu.memory_space<vmem>>) attributes {dimension_semantics = [#tpu.dimension_semantics<parallel>], iteration_bounds = array<i64: 1>, scalar_prefetch = 0 : i64, scratch_operands = 0 : i64, tpu.core_type = #tpu.core_type<tc>, window_params = [{transform_indices = @transform_0, window_bounds = array<i64: 128, 32>}, {pipeline_mode = #tpu.pipeline_mode<synchronous>, transform_indices = @transform_1, window_bounds = array<i64: 32, 512>}, {pipeline_mode = #tpu.pipeline_mode<synchronous>, transform_indices = @transform_2, window_bounds = array<i64: 1, 512>}, {pipeline_mode = #tpu.pipeline_mode<synchronous>, transform_indices = @transform_3, window_bounds = array<i64: 512, 256>}, {pipeline_mode = #tpu.pipeline_mode<synchronous>, transform_indices = @transform_4, window_bounds = array<i64: 1, 256>}, {pipeline_mode = #tpu.pipeline_mode<synchronous>, transform_indices = @transform_5, window_bounds = array<i64: 256, 128>}, {pipeline_mode = #tpu.pipeline_mode<synchronous>, transform_indices = @transform_6, window_bounds = array<i64: 1, 128>}, {transform_indices = @transform_7, window_bounds = array<i64: 128, 128>}]} {
    %c0 = arith.constant 0 : index
    %c0_0 = arith.constant 0 : index
    %0 = vector.load %arg1[%c0, %c0_0] : memref<128x32xf32, #tpu.memory_space<vmem>>, vector<128x32xf32>
    %1 = arith.truncf %0 : vector<128x32xf32> to vector<128x32xbf16>
    %c0_1 = arith.constant 0 : index
    %c0_2 = arith.constant 0 : index
    %2 = vector.load %arg2[%c0_1, %c0_2] : memref<32x512xbf16, #tpu.memory_space<vmem>>, vector<32x512xbf16>
    %cst = arith.constant dense<0.000000e+00> : vector<128x512xf32>
    %3 = tpu.matmul %1, %2, %cst {dimension_numbers = #tpu.dot_dimension_numbers<[1], [0], [0], [1], [0, 0, 1, 1], [], []>} : vector<128x32xbf16>, vector<32x512xbf16>, vector<128x512xf32> -> vector<128x512xf32>
    %c0_3 = arith.constant 0 : index
    %c0_4 = arith.constant 0 : index
    %4 = vector.load %arg3[%c0_3, %c0_4] : memref<1x512xf32, #tpu.memory_space<vmem>>, vector<1x512xf32>
    %5 = vector.broadcast %4 : vector<1x512xf32> to vector<128x512xf32>
    %6 = arith.addf %3, %5 : vector<128x512xf32>
    %cst_5 = arith.constant 0.000000e+00 : f32
    %7 = vector.broadcast %cst_5 : f32 to vector<128x512xf32>
    %8 = arith.cmpf ogt, %6, %7 : vector<128x512xf32>
    %cst_6 = arith.constant 2.000000e-01 : f32
    %9 = vector.broadcast %cst_6 : f32 to vector<128x512xf32>
    %10 = arith.mulf %9, %6 : vector<128x512xf32>
    %11 = arith.select %8, %6, %10 : vector<128x512xi1>, vector<128x512xf32>
    %12 = arith.truncf %11 : vector<128x512xf32> to vector<128x512xbf16>
    %c0_7 = arith.constant 0 : index
    %c0_8 = arith.constant 0 : index
    %13 = vector.load %arg4[%c0_7, %c0_8] : memref<512x256xbf16, #tpu.memory_space<vmem>>, vector<512x256xbf16>
    %cst_9 = arith.constant dense<0.000000e+00> : vector<128x256xf32>
    %14 = tpu.matmul %12, %13, %cst_9 {dimension_numbers = #tpu.dot_dimension_numbers<[1], [0], [0], [1], [0, 0, 1, 1], [], []>} : vector<128x512xbf16>, vector<512x256xbf16>, vector<128x256xf32> -> vector<128x256xf32>
    %c0_10 = arith.constant 0 : index
    %c0_11 = arith.constant 0 : index
    %15 = vector.load %arg5[%c0_10, %c0_11] : memref<1x256xf32, #tpu.memory_space<vmem>>, vector<1x256xf32>
    %16 = vector.broadcast %15 : vector<1x256xf32> to vector<128x256xf32>
    %17 = arith.addf %14, %16 : vector<128x256xf32>
    %cst_12 = arith.constant 0.000000e+00 : f32
    %18 = vector.broadcast %cst_12 : f32 to vector<128x256xf32>
    %19 = arith.cmpf ogt, %17, %18 : vector<128x256xf32>
    %cst_13 = arith.constant 2.000000e-01 : f32
    %20 = vector.broadcast %cst_13 : f32 to vector<128x256xf32>
    %21 = arith.mulf %20, %17 : vector<128x256xf32>
    %22 = arith.select %19, %17, %21 : vector<128x256xi1>, vector<128x256xf32>
    %23 = arith.truncf %22 : vector<128x256xf32> to vector<128x256xbf16>
    %c0_14 = arith.constant 0 : index
    %c0_15 = arith.constant 0 : index
    %24 = vector.load %arg6[%c0_14, %c0_15] : memref<256x128xbf16, #tpu.memory_space<vmem>>, vector<256x128xbf16>
    %cst_16 = arith.constant dense<0.000000e+00> : vector<128x128xf32>
    %25 = tpu.matmul %23, %24, %cst_16 {dimension_numbers = #tpu.dot_dimension_numbers<[1], [0], [0], [1], [0, 0, 1, 1], [], []>} : vector<128x256xbf16>, vector<256x128xbf16>, vector<128x128xf32> -> vector<128x128xf32>
    %c0_17 = arith.constant 0 : index
    %c0_18 = arith.constant 0 : index
    %26 = vector.load %arg7[%c0_17, %c0_18] : memref<1x128xf32, #tpu.memory_space<vmem>>, vector<1x128xf32>
    %27 = vector.broadcast %26 : vector<1x128xf32> to vector<128x128xf32>
    %28 = arith.addf %25, %27 : vector<128x128xf32>
    %29 = arith.negf %28 : vector<128x128xf32>
    %30 = math.exp %29 : vector<128x128xf32>
    %cst_19 = arith.constant 1.000000e+00 : f32
    %31 = vector.broadcast %cst_19 : f32 to vector<128x128xf32>
    %32 = arith.addf %31, %30 : vector<128x128xf32>
    %33 = arith.divf %31, %32 : vector<128x128xf32>
    %c0_20 = arith.constant 0 : index
    %c0_21 = arith.constant 0 : index
    %34 = vector.load %arg8[%c0_20, %c0_21] : memref<128x128xf32, #tpu.memory_space<vmem>>, vector<128x128xf32>
    tpu.vector_store %arg8[%c0_20, %c0_21], %33 {strides = array<i32>} : memref<128x128xf32, #tpu.memory_space<vmem>>, vector<128x128xf32>,
    return
  }
  func.func @transform_0(%arg0: i32) -> (i32, i32) {
    %c0_i32 = arith.constant 0 : i32
    %c0_i32_0 = arith.constant 0 : i32
    return %arg0, %c0_i32 : i32, i32
  }
  func.func @transform_1(%arg0: i32) -> (i32, i32) {
    %c0_i32 = arith.constant 0 : i32
    %c0_i32_0 = arith.constant 0 : i32
    %c0_i32_1 = arith.constant 0 : i32
    return %c0_i32, %c0_i32_0 : i32, i32
  }
  func.func @transform_2(%arg0: i32) -> (i32, i32) {
    %c0_i32 = arith.constant 0 : i32
    %c0_i32_0 = arith.constant 0 : i32
    %c0_i32_1 = arith.constant 0 : i32
    return %c0_i32, %c0_i32_0 : i32, i32
  }
  func.func @transform_3(%arg0: i32) -> (i32, i32) {
    %c0_i32 = arith.constant 0 : i32
    %c0_i32_0 = arith.constant 0 : i32
    %c0_i32_1 = arith.constant 0 : i32
    return %c0_i32, %c0_i32_0 : i32, i32
  }
  func.func @transform_4(%arg0: i32) -> (i32, i32) {
    %c0_i32 = arith.constant 0 : i32
    %c0_i32_0 = arith.constant 0 : i32
    %c0_i32_1 = arith.constant 0 : i32
    return %c0_i32, %c0_i32_0 : i32, i32
  }
  func.func @transform_5(%arg0: i32) -> (i32, i32) {
    %c0_i32 = arith.constant 0 : i32
    %c0_i32_0 = arith.constant 0 : i32
    %c0_i32_1 = arith.constant 0 : i32
    return %c0_i32, %c0_i32_0 : i32, i32
  }
  func.func @transform_6(%arg0: i32) -> (i32, i32) {
    %c0_i32 = arith.constant 0 : i32
    %c0_i32_0 = arith.constant 0 : i32
    %c0_i32_1 = arith.constant 0 : i32
    return %c0_i32, %c0_i32_0 : i32, i32
  }
  func.func @transform_7(%arg0: i32) -> (i32, i32) {
    %c0_i32 = arith.constant 0 : i32
    %c0_i32_0 = arith.constant 0 : i32
    return %arg0, %c0_i32 : i32, i32
  }
}

</mosaic_0001>

<llo_original>
// kernel: tpu_custom_call.1
$region0: #{tpu_custom_call.1}
  #allocation0 [shape = 'u32[]', space=smem, size = 0x4, offset = 0x4, fixed_abs, tag = 'smem constant byte address 0x4 - core index']
  #allocation1 [shape = 'u32[144,128]{1,0:T(1,128)}', space=vmem, size = 0x12000, scoped, tag = 'internal scratch']
  %s0 = inlined_call_operand.vmem [shape: f32[128,32], index: 0, kind: input, shape index: {}]
  %s1 = inlined_call_operand.hbm [shape: bf16[32,512], index: 1, kind: input, shape index: {}]
  %s2 = inlined_call_operand.vmem [shape: f32[1,512], index: 2, kind: input, shape index: {}]
  %s3 = inlined_call_operand.hbm [shape: bf16[512,256], index: 3, kind: input, shape index: {}]
  %s4 = inlined_call_operand.vmem [shape: f32[1,256], index: 4, kind: input, shape index: {}]
  %s5 = inlined_call_operand.vmem [shape: bf16[256,128], index: 5, kind: input, shape index: {}]
  %s6 = inlined_call_operand.vmem [shape: f32[1,128], index: 6, kind: input, shape index: {}]
  %s7 = inlined_call_operand.hbm [shape: f32[128,128], index: 7, kind: output, shape index: {}]
  %s8 = sld [smem:[#allocation0]]
  $region46: #{tpu_custom_call.1} parent=0
    _
  %s10 = ssub.s32 1, %s8
  %s11 = scalar_select 0, %s10, %s8
  $region1: #{tpu_custom_call.1} parent=0
    #allocation2 [shape = 'u8[32768]{0}', space=vmem, size = 0x8000, scoped, tag = 'input window, operand 1, single buffered']
    #allocation3 [shape = 's32[1]{0}', space=sflag, size = 0x4, scoped, tag = 'scoped memory for tpu_custom_call.1']
    #allocation4 [shape = 's32[1]{0}', space=sflag, size = 0x4, scoped, tag = 'scoped memory for tpu_custom_call.1']
    #allocation5 [shape = 'u8[262144]{0}', space=vmem, size = 0x40000, scoped, tag = 'input window, operand 3, single buffered']
    #allocation6 [shape = 's32[1]{0}', space=sflag, size = 0x4, scoped, tag = 'scoped memory for tpu_custom_call.1']
    #allocation7 [shape = 'u8[65536]{0}', space=vmem, size = 0x10000, scoped, tag = 'output window, operand 0, single buffered']
    %12 = vsyncpa [#allocation3], 0
    %13 = vsyncpa [#allocation6], 0
    %14 = vsyncpa [#allocation4], 0
    // Predicated region
    $region2: #{tpu_custom_call.1} parent=1 // pred_check
      _
    $region3: #{tpu_custom_call.1} parent=1 // pred_check_branch
      %16 = sbr.rel (0) target = $region5
    $region4: #{tpu_custom_call.1} parent=1 // pred_region
      _
    $region5: #{tpu_custom_call.1} parent=1 // pred_fallthru
      _
    // Predicated region
    $region6: #{tpu_custom_call.1} parent=1 // pred_check
      _
    $region7: #{tpu_custom_call.1} parent=1 // pred_check_branch
      %18 = sbr.rel (0) target = $region9
    $region8: #{tpu_custom_call.1} parent=1 // pred_region
      %s20 = ssub.s32 1024, 1024
      %21 = vsyncadd [#allocation3], %s20
      %s22 = sshll.u32 [#allocation2], 4
      %s23 = int_to_ptr.vmem [resolvable:$true] %s22
      %28 = dma.hbm_to_vmem [thread:$0]  %s1, 1024, %s23, [#allocation3], 256, 256, 16
    $region9: #{tpu_custom_call.1} parent=1 // pred_fallthru
      _
    // Predicated region
    $region10: #{tpu_custom_call.1} parent=1 // pred_check
      _
    $region11: #{tpu_custom_call.1} parent=1 // pred_check_branch
      %30 = sbr.rel (0) target = $region13
    $region12: #{tpu_custom_call.1} parent=1 // pred_region
      _
    $region13: #{tpu_custom_call.1} parent=1 // pred_fallthru
      _
    // Predicated region
    $region14: #{tpu_custom_call.1} parent=1 // pred_check
      _
    $region15: #{tpu_custom_call.1} parent=1 // pred_check_branch
      %32 = sbr.rel (0) target = $region17
    $region16: #{tpu_custom_call.1} parent=1 // pred_region
      %s34 = ssub.s32 8192, 8192
      %35 = vsyncadd [#allocation6], %s34
      %s36 = sshll.u32 [#allocation5], 4
      %s37 = int_to_ptr.vmem [resolvable:$true] %s36
      %42 = dma.hbm_to_vmem [thread:$0]  %s3, 8192, %s37, [#allocation6], 128, 128, 8
    $region17: #{tpu_custom_call.1} parent=1 // pred_fallthru
      _
    // Predicated region
    $region18: #{tpu_custom_call.1} parent=1 // pred_check
      _
    $region19: #{tpu_custom_call.1} parent=1 // pred_check_branch
      %44 = sbr.rel (0) target = $region21
    $region20: #{tpu_custom_call.1} parent=1 // pred_region
      _
    $region21: #{tpu_custom_call.1} parent=1 // pred_fallthru
      _
    // Predicated region
    $region22: #{tpu_custom_call.1} parent=1 // pred_check
      _
    $region23: #{tpu_custom_call.1} parent=1 // pred_check_branch
      %46 = sbr.rel (0) target = $region25
    $region24: #{tpu_custom_call.1} parent=1 // pred_region
      _
    $region25: #{tpu_custom_call.1} parent=1 // pred_fallthru
      _
    // Predicated region
    $region26: #{tpu_custom_call.1} parent=1 // pred_check
      _
    $region27: #{tpu_custom_call.1} parent=1 // pred_check_branch
      %48 = sbr.rel (0) target = $region29
    $region28: #{tpu_custom_call.1} parent=1 // pred_region
      _
    $region29: #{tpu_custom_call.1} parent=1 // pred_fallthru
      _
    // Predicated region
    $region30: #{tpu_custom_call.1} parent=1 // pred_check
      _
    $region31: #{tpu_custom_call.1} parent=1 // pred_check_branch
      %50 = sbr.rel (0) target = $region33
    $region32: #{tpu_custom_call.1} parent=1 // pred_region
      %51 = dma.done [#allocation3], 1024
    $region33: #{tpu_custom_call.1} parent=1 // pred_fallthru
      _
    // Predicated region
    $region34: #{tpu_custom_call.1} parent=1 // pred_check
      _
    $region35: #{tpu_custom_call.1} parent=1 // pred_check_branch
      %53 = sbr.rel (0) target = $region37
    $region36: #{tpu_custom_call.1} parent=1 // pred_region
      %54 = dma.done [#allocation6], 8192
    $region37: #{tpu_custom_call.1} parent=1 // pred_fallthru
      _
    %v56 = vld [vmem:[%s0] sm:$0xff]
    %v57 = vld [vmem:[%s0 + $0x8] sm:$0xff]
    %v58 = vld [vmem:[%s0 + $0x10] sm:$0xff]
    %v59 = vld [vmem:[%s0 + $0x18] sm:$0xff]
    %v60 = vld [vmem:[%s0 + $0x20] sm:$0xff]
    %v61 = vld [vmem:[%s0 + $0x28] sm:$0xff]
    %v62 = vld [vmem:[%s0 + $0x30] sm:$0xff]
    %v63 = vld [vmem:[%s0 + $0x38] sm:$0xff]
    %v64 = vld [vmem:[%s0 + $0x40] sm:$0xff]
    %v65 = vld [vmem:[%s0 + $0x48] sm:$0xff]
    %v66 = vld [vmem:[%s0 + $0x50] sm:$0xff]
    %v67 = vld [vmem:[%s0 + $0x58] sm:$0xff]
    %v68 = vld [vmem:[%s0 + $0x60] sm:$0xff]
    %v69 = vld [vmem:[%s0 + $0x68] sm:$0xff]
    %v70 = vld [vmem:[%s0 + $0x70] sm:$0xff]
    %v71 = vld [vmem:[%s0 + $0x78] sm:$0xff]
    %v72 = vpack.c.bf16 %v57, %v56
    %v73 = vpack.c.bf16 %v59, %v58
    %v74 = vpack.c.bf16 %v61, %v60
    %v75 = vpack.c.bf16 %v63, %v62
    %v76 = vpack.c.bf16 %v65, %v64
    %v77 = vpack.c.bf16 %v67, %v66
    %v78 = vpack.c.bf16 %v69, %v68
    %v79 = vpack.c.bf16 %v71, %v70
    %v80 = vld [vmem:[#allocation2] sm:$0xff]
    %v81 = vld [vmem:[#allocation2 + $0x8] sm:$0xff]
    %v82 = vld [vmem:[#allocation2 + $0x10] sm:$0xff]
    %v83 = vld [vmem:[#allocation2 + $0x18] sm:$0xff]
    %v84 = vld [vmem:[#allocation2 + $0x20] sm:$0xff]
    %v85 = vld [vmem:[#allocation2 + $0x28] sm:$0xff]
    %v86 = vld [vmem:[#allocation2 + $0x30] sm:$0xff]
    %v87 = vld [vmem:[#allocation2 + $0x38] sm:$0xff]
    %v88 = vld [vmem:[%s2] sm:$0xf]
    %v90 = vlaneseq
    %v91 = vshrl.u32 %v90, 7
    %v92 = vsub.s32 0, %v91
    %v93 = vrot.slane %v88, %v92
    %v94 = vlaneseq
    %v95 = vshrl.u32 %v94, 7
    %v96 = vsub.s32 1, %v95
    %v97 = vrot.slane %v88, %v96
    %v98 = vlaneseq
    %v99 = vshrl.u32 %v98, 7
    %v100 = vsub.s32 2, %v99
    %v101 = vrot.slane %v88, %v100
    %v102 = vlaneseq
    %v103 = vshrl.u32 %v102, 7
    %v104 = vsub.s32 3, %v103
    %v105 = vrot.slane %v88, %v104
    %v118 = vunpack.c.l.b16 %v80
    %v119 = vunpack.c.h.b16 %v80
    %v120 = vunpack.c.l.b16 %v81
    %v121 = vunpack.c.h.b16 %v81
    %v122 = vunpack.c.l.b16 %v82
    %v123 = vunpack.c.h.b16 %v82
    %v124 = vunpack.c.l.b16 %v83
    %v125 = vunpack.c.h.b16 %v83
    %v126 = vunpack.c.l.b16 %v84
    %v127 = vunpack.c.h.b16 %v84
    %v128 = vunpack.c.l.b16 %v85
    %v129 = vunpack.c.h.b16 %v85
    %v130 = vunpack.c.l.b16 %v86
    %v131 = vunpack.c.h.b16 %v86
    %v132 = vunpack.c.l.b16 %v87
    %v133 = vunpack.c.h.b16 %v87
    %v134 = vpack.c.b16 %v122, %v118
    %v135 = vpack.c.b16 %v123, %v119
    %v136 = vpack.c.b16 %v124, %v120
    %v137 = vpack.c.b16 %v125, %v121
    %v138 = vpack.c.b16 %v130, %v126
    %v139 = vpack.c.b16 %v131, %v127
    %v140 = vpack.c.b16 %v132, %v128
    %v141 = vpack.c.b16 %v133, %v129
    %vm150 = vcmask 261120
    %v152 = vsel %vm150, %v72, 0
    %v155 = vsel %vm150, %v73, 0
    %v158 = vsel %vm150, %v74, 0
    %v161 = vsel %vm150, %v75, 0
    %v164 = vsel %vm150, %v76, 0
    %v167 = vsel %vm150, %v77, 0
    %v170 = vsel %vm150, %v78, 0
    %v173 = vsel %vm150, %v79, 0
    %175 = vmatprep.subr.bf16.mxu0 %v135
    %176 = vmatpush1.bf16.msra.mxu0 %v134
    %177 = vmatprep.subr.bf16.mxu0 %v139
    %178 = vmatpush1.bf16.msra.mxu0 %v138
    %179 = vmatprep.subr.bf16.mxu0 0
    %180 = vmatpush1.bf16.msra.mxu0 0
    %181 = vmatprep.subr.bf16.mxu0 0
    %182 = vmatpush1.bf16.msra.mxu0 0
    %183 = vmatprep.subr.bf16.mxu0 0
    %184 = vmatpush1.bf16.msra.mxu0 0
    %185 = vmatprep.subr.bf16.mxu0 0
    %186 = vmatpush1.bf16.msra.mxu0 0
    %187 = vmatprep.subr.bf16.mxu0 0
    %188 = vmatpush1.bf16.msra.mxu0 0
    %189 = vmatprep.subr.bf16.mxu0 0
    %190 = vmatpush1.bf16.msra.mxu0 0
    %191 = vmatprep.subr.bf16.mxu0 0
    %192 = vmatpush1.bf16.msra.mxu0 0
    %193 = vmatprep.subr.bf16.mxu0 0
    %194 = vmatpush1.bf16.msra.mxu0 0
    %195 = vmatprep.subr.bf16.mxu0 0
    %196 = vmatpush1.bf16.msra.mxu0 0
    %197 = vmatprep.subr.bf16.mxu0 0
    %198 = vmatpush1.bf16.msra.mxu0 0
    %199 = vmatprep.subr.bf16.mxu0 0
    %200 = vmatpush1.bf16.msra.mxu0 0
    %201 = vmatprep.subr.bf16.mxu0 0
    %202 = vmatpush1.bf16.msra.mxu0 0
    %203 = vmatprep.subr.bf16.mxu0 0
    %204 = vmatpush1.bf16.msra.mxu0 0
    %205 = vmatprep.subr.bf16.mxu0 0
    %206 = vmatpush1.bf16.msra.mxu0 0
    %207 = vmatprep.mubr.bf16.mxu0 0
    %208 = vmatmul.mubr.bf16.gmra.mrb[0].mxu0 %v152
    %v209 = vpop.f32.mrb[0].mxu0
    %v210 = vadd.f32 %v93, %v209
    %v211 = vpop.f32.mrb[0].mxu0
    %v212 = vadd.f32 %v97, %v211
    %v213 = vpop.f32.mrb[0].mxu0
    %v214 = vadd.f32 %v93, %v213
    %v215 = vpop.f32.mrb[0].mxu0
    %v216 = vadd.f32 %v97, %v215
    %217 = vmatprep.mubr.bf16.mxu0 0
    %218 = vmatmul.mubr.bf16.gmra.mrb[0].mxu0 %v155
    %v219 = vpop.f32.mrb[0].mxu0
    %v220 = vadd.f32 %v93, %v219
    %v221 = vpop.f32.mrb[0].mxu0
    %v222 = vadd.f32 %v97, %v221
    %v223 = vpop.f32.mrb[0].mxu0
    %v224 = vadd.f32 %v93, %v223
    %v225 = vpop.f32.mrb[0].mxu0
    %v226 = vadd.f32 %v97, %v225
    %227 = vmatprep.mubr.bf16.mxu0 0
    %228 = vmatmul.mubr.bf16.gmra.mrb[0].mxu0 %v158
    %v229 = vpop.f32.mrb[0].mxu0
    %v230 = vadd.f32 %v93, %v229
    %v231 = vpop.f32.mrb[0].mxu0
    %v232 = vadd.f32 %v97, %v231
    %v233 = vpop.f32.mrb[0].mxu0
    %v234 = vadd.f32 %v93, %v233
    %v235 = vpop.f32.mrb[0].mxu0
    %v236 = vadd.f32 %v97, %v235
    %237 = vmatprep.mubr.bf16.mxu0 0
    %238 = vmatmul.mubr.bf16.gmra.mrb[0].mxu0 %v161
    %v239 = vpop.f32.mrb[0].mxu0
    %v240 = vadd.f32 %v93, %v239
    %v241 = vpop.f32.mrb[0].mxu0
    %v242 = vadd.f32 %v97, %v241
    %v243 = vpop.f32.mrb[0].mxu0
    %v244 = vadd.f32 %v93, %v243
    %v245 = vpop.f32.mrb[0].mxu0
    %v246 = vadd.f32 %v97, %v245
    %247 = vmatprep.mubr.bf16.mxu0 0
    %248 = vmatmul.mubr.bf16.gmra.mrb[0].mxu0 %v164
    %v249 = vpop.f32.mrb[0].mxu0
    %v250 = vadd.f32 %v93, %v249
    %v251 = vpop.f32.mrb[0].mxu0
    %v252 = vadd.f32 %v97, %v251
    %v253 = vpop.f32.mrb[0].mxu0
    %v254 = vadd.f32 %v93, %v253
    %v255 = vpop.f32.mrb[0].mxu0
    %v256 = vadd.f32 %v97, %v255
    %257 = vmatprep.mubr.bf16.mxu0 0
    %258 = vmatmul.mubr.bf16.gmra.mrb[0].mxu0 %v167
    %v259 = vpop.f32.mrb[0].mxu0
    %v260 = vadd.f32 %v93, %v259
    %v261 = vpop.f32.mrb[0].mxu0
    %v262 = vadd.f32 %v97, %v261
    %v263 = vpop.f32.mrb[0].mxu0
    %v264 = vadd.f32 %v93, %v263
    %v265 = vpop.f32.mrb[0].mxu0
    %v266 = vadd.f32 %v97, %v265
    %267 = vmatprep.mubr.bf16.mxu0 0
    %268 = vmatmul.mubr.bf16.gmra.mrb[0].mxu0 %v170
    %v269 = vpop.f32.mrb[0].mxu0
    %v270 = vadd.f32 %v93, %v269
    %v271 = vpop.f32.mrb[0].mxu0
    %v272 = vadd.f32 %v97, %v271
    %v273 = vpop.f32.mrb[0].mxu0
    %v274 = vadd.f32 %v93, %v273
    %v275 = vpop.f32.mrb[0].mxu0
    %v276 = vadd.f32 %v97, %v275
    %277 = vmatprep.mubr.bf16.mxu0 0
    %278 = vmatmul.mubr.bf16.gmra.mrb[0].mxu0 %v173
    %v279 = vpop.f32.mrb[0].mxu0
    %v280 = vadd.f32 %v93, %v279
    %v281 = vpop.f32.mrb[0].mxu0
    %v282 = vadd.f32 %v97, %v281
    %v283 = vpop.f32.mrb[0].mxu0
    %v284 = vadd.f32 %v93, %v283
    %v285 = vpop.f32.mrb[0].mxu0
    %v286 = vadd.f32 %v97, %v285
    %287 = vdwg.mxu0
    %288 = vmatprep.subr.bf16.mxu0 %v137
    %289 = vmatpush1.bf16.msra.mxu0 %v136
    %290 = vmatprep.subr.bf16.mxu0 %v141
    %291 = vmatpush1.bf16.msra.mxu0 %v140
    %292 = vmatprep.subr.bf16.mxu0 0
    %293 = vmatpush1.bf16.msra.mxu0 0
    %294 = vmatprep.subr.bf16.mxu0 0
    %295 = vmatpush1.bf16.msra.mxu0 0
    %296 = vmatprep.subr.bf16.mxu0 0
    %297 = vmatpush1.bf16.msra.mxu0 0
    %298 = vmatprep.subr.bf16.mxu0 0
    %299 = vmatpush1.bf16.msra.mxu0 0
    %300 = vmatprep.subr.bf16.mxu0 0
    %301 = vmatpush1.bf16.msra.mxu0 0
    %302 = vmatprep.subr.bf16.mxu0 0
    %303 = vmatpush1.bf16.msra.mxu0 0
    %304 = vmatprep.subr.bf16.mxu0 0
    %305 = vmatpush1.bf16.msra.mxu0 0
    %306 = vmatprep.subr.bf16.mxu0 0
    %307 = vmatpush1.bf16.msra.mxu0 0
    %308 = vmatprep.subr.bf16.mxu0 0
    %309 = vmatpush1.bf16.msra.mxu0 0
    %310 = vmatprep.subr.bf16.mxu0 0
    %311 = vmatpush1.bf16.msra.mxu0 0
    %312 = vmatprep.subr.bf16.mxu0 0
    %313 = vmatpush1.bf16.msra.mxu0 0
    %314 = vmatprep.subr.bf16.mxu0 0
    %315 = vmatpush1.bf16.msra.mxu0 0
    %316 = vmatprep.subr.bf16.mxu0 0
    %317 = vmatpush1.bf16.msra.mxu0 0
    %318 = vmatprep.subr.bf16.mxu0 0
    %319 = vmatpush1.bf16.msra.mxu0 0
    %320 = vmatprep.mubr.bf16.mxu0 0
    %321 = vmatmul.mubr.bf16.gmra.mrb[0].mxu0 %v152
    %v322 = vpop.f32.mrb[0].mxu0
    %v323 = vadd.f32 %v101, %v322
    %v324 = vpop.f32.mrb[0].mxu0
    %v325 = vadd.f32 %v105, %v324
    %v326 = vpop.f32.mrb[0].mxu0
    %v327 = vadd.f32 %v101, %v326
    %v328 = vpop.f32.mrb[0].mxu0
    %v329 = vadd.f32 %v105, %v328
    %330 = vmatprep.mubr.bf16.mxu0 0
    %331 = vmatmul.mubr.bf16.gmra.mrb[0].mxu0 %v155
    %v332 = vpop.f32.mrb[0].mxu0
    %v333 = vadd.f32 %v101, %v332
    %v334 = vpop.f32.mrb[0].mxu0
    %v335 = vadd.f32 %v105, %v334
    %v336 = vpop.f32.mrb[0].mxu0
    %v337 = vadd.f32 %v101, %v336
    %v338 = vpop.f32.mrb[0].mxu0
    %v339 = vadd.f32 %v105, %v338
    %340 = vmatprep.mubr.bf16.mxu0 0
    %341 = vmatmul.mubr.bf16.gmra.mrb[0].mxu0 %v158
    %v342 = vpop.f32.mrb[0].mxu0
    %v343 = vadd.f32 %v101, %v342
    %v344 = vpop.f32.mrb[0].mxu0
    %v345 = vadd.f32 %v105, %v344
    %v346 = vpop.f32.mrb[0].mxu0
    %v347 = vadd.f32 %v101, %v346
    %v348 = vpop.f32.mrb[0].mxu0
    %v349 = vadd.f32 %v105, %v348
    %350 = vmatprep.mubr.bf16.mxu0 0
    %351 = vmatmul.mubr.bf16.gmra.mrb[0].mxu0 %v161
    %v352 = vpop.f32.mrb[0].mxu0
    %v353 = vadd.f32 %v101, %v352
    %v354 = vpop.f32.mrb[0].mxu0
    %v355 = vadd.f32 %v105, %v354
    %v356 = vpop.f32.mrb[0].mxu0
    %v357 = vadd.f32 %v101, %v356
    %v358 = vpop.f32.mrb[0].mxu0
    %v359 = vadd.f32 %v105, %v358
    %360 = vmatprep.mubr.bf16.mxu0 0
    %361 = vmatmul.mubr.bf16.gmra.mrb[0].mxu0 %v164
    %v362 = vpop.f32.mrb[0].mxu0
    %v363 = vadd.f32 %v101, %v362
    %v364 = vpop.f32.mrb[0].mxu0
    %v365 = vadd.f32 %v105, %v364
    %v366 = vpop.f32.mrb[0].mxu0
    %v367 = vadd.f32 %v101, %v366
    %v368 = vpop.f32.mrb[0].mxu0
    %v369 = vadd.f32 %v105, %v368
    %370 = vmatprep.mubr.bf16.mxu0 0
    %371 = vmatmul.mubr.bf16.gmra.mrb[0].mxu0 %v167
    %v372 = vpop.f32.mrb[0].mxu0
    %v373 = vadd.f32 %v101, %v372
    %v374 = vpop.f32.mrb[0].mxu0
    %v375 = vadd.f32 %v105, %v374
    %v376 = vpop.f32.mrb[0].mxu0
    %v377 = vadd.f32 %v101, %v376
    %v378 = vpop.f32.mrb[0].mxu0
    %v379 = vadd.f32 %v105, %v378
    %380 = vmatprep.mubr.bf16.mxu0 0
    %381 = vmatmul.mubr.bf16.gmra.mrb[0].mxu0 %v170
    %v382 = vpop.f32.mrb[0].mxu0
    %v383 = vadd.f32 %v101, %v382
    %v384 = vpop.f32.mrb[0].mxu0
    %v385 = vadd.f32 %v105, %v384
    %v386 = vpop.f32.mrb[0].mxu0
    %v387 = vadd.f32 %v101, %v386
    %v388 = vpop.f32.mrb[0].mxu0
    %v389 = vadd.f32 %v105, %v388
    %390 = vmatprep.mubr.bf16.mxu0 0
    %391 = vmatmul.mubr.bf16.gmra.mrb[0].mxu0 %v173
    %v392 = vpop.f32.mrb[0].mxu0
    %v393 = vadd.f32 %v101, %v392
    %v394 = vpop.f32.mrb[0].mxu0
    %v395 = vadd.f32 %v105, %v394
    %v396 = vpop.f32.mrb[0].mxu0
    %v397 = vadd.f32 %v101, %v396
    %v398 = vpop.f32.mrb[0].mxu0
    %v399 = vadd.f32 %v105, %v398
    %400 = vdwg.mxu0
    %vm401 = vcmp.gt.f32.partialorder %v210, 0.0
    %vm402 = vcmp.gt.f32.partialorder %v212, 0.0
    %vm403 = vcmp.gt.f32.partialorder %v323, 0.0
    %vm404 = vcmp.gt.f32.partialorder %v325, 0.0
    %vm405 = vcmp.gt.f32.partialorder %v214, 0.0
    %vm406 = vcmp.gt.f32.partialorder %v216, 0.0
    %vm407 = vcmp.gt.f32.partialorder %v327, 0.0
    %vm408 = vcmp.gt.f32.partialorder %v329, 0.0
    %vm409 = vcmp.gt.f32.partialorder %v220, 0.0
    %vm410 = vcmp.gt.f32.partialorder %v222, 0.0
    %vm411 = vcmp.gt.f32.partialorder %v333, 0.0
    %vm412 = vcmp.gt.f32.partialorder %v335, 0.0
    %vm413 = vcmp.gt.f32.partialorder %v224, 0.0
    %vm414 = vcmp.gt.f32.partialorder %v226, 0.0
    %vm415 = vcmp.gt.f32.partialorder %v337, 0.0
    %vm416 = vcmp.gt.f32.partialorder %v339, 0.0
    %vm417 = vcmp.gt.f32.partialorder %v230, 0.0
    %vm418 = vcmp.gt.f32.partialorder %v232, 0.0
    %vm419 = vcmp.gt.f32.partialorder %v343, 0.0
    %vm420 = vcmp.gt.f32.partialorder %v345, 0.0
    %vm421 = vcmp.gt.f32.partialorder %v234, 0.0
    %vm422 = vcmp.gt.f32.partialorder %v236, 0.0
    %vm423 = vcmp.gt.f32.partialorder %v347, 0.0
    %vm424 = vcmp.gt.f32.partialorder %v349, 0.0
    %vm425 = vcmp.gt.f32.partialorder %v240, 0.0
    %vm426 = vcmp.gt.f32.partialorder %v242, 0.0
    %vm427 = vcmp.gt.f32.partialorder %v353, 0.0
    %vm428 = vcmp.gt.f32.partialorder %v355, 0.0
    %vm429 = vcmp.gt.f32.partialorder %v244, 0.0
    %vm430 = vcmp.gt.f32.partialorder %v246, 0.0
    %vm431 = vcmp.gt.f32.partialorder %v357, 0.0
    %vm432 = vcmp.gt.f32.partialorder %v359, 0.0
    %vm433 = vcmp.gt.f32.partialorder %v250, 0.0
    %vm434 = vcmp.gt.f32.partialorder %v252, 0.0
    %vm435 = vcmp.gt.f32.partialorder %v363, 0.0
    %vm436 = vcmp.gt.f32.partialorder %v365, 0.0
    %vm437 = vcmp.gt.f32.partialorder %v254, 0.0
    %vm438 = vcmp.gt.f32.partialorder %v256, 0.0
    %vm439 = vcmp.gt.f32.partialorder %v367, 0.0
    %vm440 = vcmp.gt.f32.partialorder %v369, 0.0
    %vm441 = vcmp.gt.f32.partialorder %v260, 0.0
    %vm442 = vcmp.gt.f32.partialorder %v262, 0.0
    %vm443 = vcmp.gt.f32.partialorder %v373, 0.0
    %vm444 = vcmp.gt.f32.partialorder %v375, 0.0
    %vm445 = vcmp.gt.f32.partialorder %v264, 0.0
    %vm446 = vcmp.gt.f32.partialorder %v266, 0.0
    %vm447 = vcmp.gt.f32.partialorder %v377, 0.0
    %vm448 = vcmp.gt.f32.partialorder %v379, 0.0
    %vm449 = vcmp.gt.f32.partialorder %v270, 0.0
    %vm450 = vcmp.gt.f32.partialorder %v272, 0.0
    %vm451 = vcmp.gt.f32.partialorder %v383, 0.0
    %vm452 = vcmp.gt.f32.partialorder %v385, 0.0
    %vm453 = vcmp.gt.f32.partialorder %v274, 0.0
    %vm454 = vcmp.gt.f32.partialorder %v276, 0.0
    %vm455 = vcmp.gt.f32.partialorder %v387, 0.0
    %vm456 = vcmp.gt.f32.partialorder %v389, 0.0
    %vm457 = vcmp.gt.f32.partialorder %v280, 0.0
    %vm458 = vcmp.gt.f32.partialorder %v282, 0.0
    %vm459 = vcmp.gt.f32.partialorder %v393, 0.0
    %vm460 = vcmp.gt.f32.partialorder %v395, 0.0
    %vm461 = vcmp.gt.f32.partialorder %v284, 0.0
    %vm462 = vcmp.gt.f32.partialorder %v286, 0.0
    %vm463 = vcmp.gt.f32.partialorder %v397, 0.0
    %vm464 = vcmp.gt.f32.partialorder %v399, 0.0
    %v465 = vmul.f32 %v210, 0.2
    %v466 = vmul.f32 %v212, 0.2
    %v467 = vmul.f32 %v323, 0.2
    %v468 = vmul.f32 %v325, 0.2
    %v469 = vmul.f32 %v214, 0.2
    %v470 = vmul.f32 %v216, 0.2
    %v471 = vmul.f32 %v327, 0.2
    %v472 = vmul.f32 %v329, 0.2
    %v473 = vmul.f32 %v220, 0.2
    %v474 = vmul.f32 %v222, 0.2
    %v475 = vmul.f32 %v333, 0.2
    %v476 = vmul.f32 %v335, 0.2
    %v477 = vmul.f32 %v224, 0.2
    %v478 = vmul.f32 %v226, 0.2
    %v479 = vmul.f32 %v337, 0.2
    %v480 = vmul.f32 %v339, 0.2
    %v481 = vmul.f32 %v230, 0.2
    %v482 = vmul.f32 %v232, 0.2
    %v483 = vmul.f32 %v343, 0.2
    %v484 = vmul.f32 %v345, 0.2
    %v485 = vmul.f32 %v234, 0.2
    %v486 = vmul.f32 %v236, 0.2
    %v487 = vmul.f32 %v347, 0.2
    %v488 = vmul.f32 %v349, 0.2
    %v489 = vmul.f32 %v240, 0.2
    %v490 = vmul.f32 %v242, 0.2
    %v491 = vmul.f32 %v353, 0.2
    %v492 = vmul.f32 %v355, 0.2
    %v493 = vmul.f32 %v244, 0.2
    %v494 = vmul.f32 %v246, 0.2
    %v495 = vmul.f32 %v357, 0.2
    %v496 = vmul.f32 %v359, 0.2
    %v497 = vmul.f32 %v250, 0.2
    %v498 = vmul.f32 %v252, 0.2
    %v499 = vmul.f32 %v363, 0.2
    %v500 = vmul.f32 %v365, 0.2
    %v501 = vmul.f32 %v254, 0.2
    %v502 = vmul.f32 %v256, 0.2
    %v503 = vmul.f32 %v367, 0.2
    %v504 = vmul.f32 %v369, 0.2
    %v505 = vmul.f32 %v260, 0.2
    %v506 = vmul.f32 %v262, 0.2
    %v507 = vmul.f32 %v373, 0.2
    %v508 = vmul.f32 %v375, 0.2
    %v509 = vmul.f32 %v264, 0.2
    %v510 = vmul.f32 %v266, 0.2
    %v511 = vmul.f32 %v377, 0.2
    %v512 = vmul.f32 %v379, 0.2
    %v513 = vmul.f32 %v270, 0.2
    %v514 = vmul.f32 %v272, 0.2
    %v515 = vmul.f32 %v383, 0.2
    %v516 = vmul.f32 %v385, 0.2
    %v517 = vmul.f32 %v274, 0.2
    %v518 = vmul.f32 %v276, 0.2
    %v519 = vmul.f32 %v387, 0.2
    %v520 = vmul.f32 %v389, 0.2
    %v521 = vmul.f32 %v280, 0.2
    %v522 = vmul.f32 %v282, 0.2
    %v523 = vmul.f32 %v393, 0.2
    %v524 = vmul.f32 %v395, 0.2
    %v525 = vmul.f32 %v284, 0.2
    %v526 = vmul.f32 %v286, 0.2
    %v527 = vmul.f32 %v397, 0.2
    %v528 = vmul.f32 %v399, 0.2
    %v529 = vsel %vm401, %v210, %v465
    %v530 = vsel %vm402, %v212, %v466
    %v531 = vsel %vm403, %v323, %v467
    %v532 = vsel %vm404, %v325, %v468
    %v533 = vsel %vm405, %v214, %v469
    %v534 = vsel %vm406, %v216, %v470
    %v535 = vsel %vm407, %v327, %v471
    %v536 = vsel %vm408, %v329, %v472
    %v537 = vsel %vm409, %v220, %v473
    %v538 = vsel %vm410, %v222, %v474
    %v539 = vsel %vm411, %v333, %v475
    %v540 = vsel %vm412, %v335, %v476
    %v541 = vsel %vm413, %v224, %v477
    %v542 = vsel %vm414, %v226, %v478
    %v543 = vsel %vm415, %v337, %v479
    %v544 = vsel %vm416, %v339, %v480
    %v545 = vsel %vm417, %v230, %v481
    %v546 = vsel %vm418, %v232, %v482
    %v547 = vsel %vm419, %v343, %v483
    %v548 = vsel %vm420, %v345, %v484
    %v549 = vsel %vm421, %v234, %v485
    %v550 = vsel %vm422, %v236, %v486
    %v551 = vsel %vm423, %v347, %v487
    %v552 = vsel %vm424, %v349, %v488
    %v553 = vsel %vm425, %v240, %v489
    %v554 = vsel %vm426, %v242, %v490
    %v555 = vsel %vm427, %v353, %v491
    %v556 = vsel %vm428, %v355, %v492
    %v557 = vsel %vm429, %v244, %v493
    %v558 = vsel %vm430, %v246, %v494
    %v559 = vsel %vm431, %v357, %v495
    %v560 = vsel %vm432, %v359, %v496
    %v561 = vsel %vm433, %v250, %v497
    %v562 = vsel %vm434, %v252, %v498
    %v563 = vsel %vm435, %v363, %v499
    %v564 = vsel %vm436, %v365, %v500
    %v565 = vsel %vm437, %v254, %v501
    %v566 = vsel %vm438, %v256, %v502
    %v567 = vsel %vm439, %v367, %v503
    %v568 = vsel %vm440, %v369, %v504
    %v569 = vsel %vm441, %v260, %v505
    %v570 = vsel %vm442, %v262, %v506
    %v571 = vsel %vm443, %v373, %v507
    %v572 = vsel %vm444, %v375, %v508
    %v573 = vsel %vm445, %v264, %v509
    %v574 = vsel %vm446, %v266, %v510
    %v575 = vsel %vm447, %v377, %v511
    %v576 = vsel %vm448, %v379, %v512
    %v577 = vsel %vm449, %v270, %v513
    %v578 = vsel %vm450, %v272, %v514
    %v579 = vsel %vm451, %v383, %v515
    %v580 = vsel %vm452, %v385, %v516
    %v581 = vsel %vm453, %v274, %v517
    %v582 = vsel %vm454, %v276, %v518
    %v583 = vsel %vm455, %v387, %v519
    %v584 = vsel %vm456, %v389, %v520
    %v585 = vsel %vm457, %v280, %v521
    %v586 = vsel %vm458, %v282, %v522
    %v587 = vsel %vm459, %v393, %v523
    %v588 = vsel %vm460, %v395, %v524
    %v589 = vsel %vm461, %v284, %v525
    %v590 = vsel %vm462, %v286, %v526
    %v591 = vsel %vm463, %v397, %v527
    %v592 = vsel %vm464, %v399, %v528
    %v593 = vpack.c.bf16 %v533, %v529
    %v594 = vpack.c.bf16 %v534, %v530
    %v595 = vpack.c.bf16 %v535, %v531
    %v596 = vpack.c.bf16 %v536, %v532
    %v597 = vpack.c.bf16 %v541, %v537
    %v598 = vpack.c.bf16 %v542, %v538
    %v599 = vpack.c.bf16 %v543, %v539
    %v600 = vpack.c.bf16 %v544, %v540
    %v601 = vpack.c.bf16 %v549, %v545
    %v602 = vpack.c.bf16 %v550, %v546
    %v603 = vpack.c.bf16 %v551, %v547
    %v604 = vpack.c.bf16 %v552, %v548
    %v605 = vpack.c.bf16 %v557, %v553
    %v606 = vpack.c.bf16 %v558, %v554
    %v607 = vpack.c.bf16 %v559, %v555
    %v608 = vpack.c.bf16 %v560, %v556
    %v609 = vpack.c.bf16 %v565, %v561
    %v610 = vpack.c.bf16 %v566, %v562
    %v611 = vpack.c.bf16 %v567, %v563
    %v612 = vpack.c.bf16 %v568, %v564
    %v613 = vpack.c.bf16 %v573, %v569
    %v614 = vpack.c.bf16 %v574, %v570
    %v615 = vpack.c.bf16 %v575, %v571
    %v616 = vpack.c.bf16 %v576, %v572
    %v617 = vpack.c.bf16 %v581, %v577
    %v618 = vpack.c.bf16 %v582, %v578
    %v619 = vpack.c.bf16 %v583, %v579
    %v620 = vpack.c.bf16 %v584, %v580
    %v621 = vpack.c.bf16 %v589, %v585
    %v622 = vpack.c.bf16 %v590, %v586
    %v623 = vpack.c.bf16 %v591, %v587
    %v624 = vpack.c.bf16 %v592, %v588
    %v625 = vld [vmem:[#allocation5] sm:$0xff]
    %v626 = vld [vmem:[#allocation5 + $0x8] sm:$0xff]
    %v627 = vld [vmem:[#allocation5 + $0x10] sm:$0xff]
    %v628 = vld [vmem:[#allocation5 + $0x18] sm:$0xff]
    %v629 = vld [vmem:[#allocation5 + $0x20] sm:$0xff]
    %v630 = vld [vmem:[#allocation5 + $0x28] sm:$0xff]
    %v631 = vld [vmem:[#allocation5 + $0x30] sm:$0xff]
    %v632 = vld [vmem:[#allocation5 + $0x38] sm:$0xff]
    %v633 = vld [vmem:[#allocation5 + $0x40] sm:$0xff]
    %v634 = vld [vmem:[#allocation5 + $0x48] sm:$0xff]
    %v635 = vld [vmem:[#allocation5 + $0x50] sm:$0xff]
    %v636 = vld [vmem:[#allocation5 + $0x58] sm:$0xff]
    %v637 = vld [vmem:[#allocation5 + $0x60] sm:$0xff]
    %v638 = vld [vmem:[#allocation5 + $0x68] sm:$0xff]
    %v639 = vld [vmem:[#allocation5 + $0x70] sm:$0xff]
    %v640 = vld [vmem:[#allocation5 + $0x78] sm:$0xff]
    %v641 = vld [vmem:[#allocation5 + $0x80] sm:$0xff]
    %v642 = vld [vmem:[#allocation5 + $0x88] sm:$0xff]
    %v643 = vld [vmem:[#allocation5 + $0x90] sm:$0xff]
    %v644 = vld [vmem:[#allocation5 + $0x98] sm:$0xff]
    %v645 = vld [vmem:[#allocation5 + $0xa0] sm:$0xff]
    %v646 = vld [vmem:[#allocation5 + $0xa8] sm:$0xff]
    %v647 = vld [vmem:[#allocation5 + $0xb0] sm:$0xff]
    %v648 = vld [vmem:[#allocation5 + $0xb8] sm:$0xff]
    %v649 = vld [vmem:[#allocation5 + $0xc0] sm:$0xff]
    %v650 = vld [vmem:[#allocation5 + $0xc8] sm:$0xff]
    %v651 = vld [vmem:[#allocation5 + $0xd0] sm:$0xff]
    %v652 = vld [vmem:[#allocation5 + $0xd8] sm:$0xff]
    %v653 = vld [vmem:[#allocation5 + $0xe0] sm:$0xff]
    %v654 = vld [vmem:[#allocation5 + $0xe8] sm:$0xff]
    %v655 = vld [vmem:[#allocation5 + $0xf0] sm:$0xff]
    %v656 = vld [vmem:[#allocation5 + $0xf8] sm:$0xff]
    %v657 = vld [vmem:[#allocation5 + $0x100] sm:$0xff]
    %v658 = vld [vmem:[#allocation5 + $0x108] sm:$0xff]
    %v659 = vld [vmem:[#allocation5 + $0x110] sm:$0xff]
    %v660 = vld [vmem:[#allocation5 + $0x118] sm:$0xff]
    %v661 = vld [vmem:[#allocation5 + $0x120] sm:$0xff]
    %v662 = vld [vmem:[#allocation5 + $0x128] sm:$0xff]
    %v663 = vld [vmem:[#allocation5 + $0x130] sm:$0xff]
    %v664 = vld [vmem:[#allocation5 + $0x138] sm:$0xff]
    %v665 = vld [vmem:[#allocation5 + $0x140] sm:$0xff]
    %v666 = vld [vmem:[#allocation5 + $0x148] sm:$0xff]
    %v667 = vld [vmem:[#allocation5 + $0x150] sm:$0xff]
    %v668 = vld [vmem:[#allocation5 + $0x158] sm:$0xff]
    %v669 = vld [vmem:[#allocation5 + $0x160] sm:$0xff]
    %v670 = vld [vmem:[#allocation5 + $0x168] sm:$0xff]
    %v671 = vld [vmem:[#allocation5 + $0x170] sm:$0xff]
    %v672 = vld [vmem:[#allocation5 + $0x178] sm:$0xff]
    %v673 = vld [vmem:[#allocation5 + $0x180] sm:$0xff]
    %v674 = vld [vmem:[#allocation5 + $0x188] sm:$0xff]
    %v675 = vld [vmem:[#allocation5 + $0x190] sm:$0xff]
    %v676 = vld [vmem:[#allocation5 + $0x198] sm:$0xff]
    %v677 = vld [vmem:[#allocation5 + $0x1a0] sm:$0xff]
    %v678 = vld [vmem:[#allocation5 + $0x1a8] sm:$0xff]
    %v679 = vld [vmem:[#allocation5 + $0x1b0] sm:$0xff]
    %v680 = vld [vmem:[#allocation5 + $0x1b8] sm:$0xff]
    %v681 = vld [vmem:[#allocation5 + $0x1c0] sm:$0xff]
    %v682 = vld [vmem:[#allocation5 + $0x1c8] sm:$0xff]
    %v683 = vld [vmem:[#allocation5 + $0x1d0] sm:$0xff]
    %v684 = vld [vmem:[#allocation5 + $0x1d8] sm:$0xff]
    %v685 = vld [vmem:[#allocation5 + $0x1e0] sm:$0xff]
    %v686 = vld [vmem:[#allocation5 + $0x1e8] sm:$0xff]
    %v687 = vld [vmem:[#allocation5 + $0x1f0] sm:$0xff]
    %v688 = vld [vmem:[#allocation5 + $0x1f8] sm:$0xff]
    %v689 = vld [vmem:[%s4] sm:$0x3]
    %v691 = vlaneseq
    %v692 = vshrl.u32 %v691, 7
    %v693 = vsub.s32 0, %v692
    %v694 = vrot.slane %v689, %v693
    %v695 = vlaneseq
    %v696 = vshrl.u32 %v695, 7
    %v697 = vsub.s32 1, %v696
    %v698 = vrot.slane %v689, %v697
    %v765 = vunpack.c.l.b16 %v625
    %v766 = vunpack.c.h.b16 %v625
    %v767 = vunpack.c.l.b16 %v626
    %v768 = vunpack.c.h.b16 %v626
    %v769 = vunpack.c.l.b16 %v627
    %v770 = vunpack.c.h.b16 %v627
    %v771 = vunpack.c.l.b16 %v628
    %v772 = vunpack.c.h.b16 %v628
    %v773 = vunpack.c.l.b16 %v629
    %v774 = vunpack.c.h.b16 %v629
    %v775 = vunpack.c.l.b16 %v630
    %v776 = vunpack.c.h.b16 %v630
    %v777 = vunpack.c.l.b16 %v631
    %v778 = vunpack.c.h.b16 %v631
    %v779 = vunpack.c.l.b16 %v632
    %v780 = vunpack.c.h.b16 %v632
    %v781 = vunpack.c.l.b16 %v633
    %v782 = vunpack.c.h.b16 %v633
    %v783 = vunpack.c.l.b16 %v634
    %v784 = vunpack.c.h.b16 %v634
    %v785 = vunpack.c.l.b16 %v635
    %v786 = vunpack.c.h.b16 %v635
    %v787 = vunpack.c.l.b16 %v636
    %v788 = vunpack.c.h.b16 %v636
    %v789 = vunpack.c.l.b16 %v637
    %v790 = vunpack.c.h.b16 %v637
    %v791 = vunpack.c.l.b16 %v638
    %v792 = vunpack.c.h.b16 %v638
    %v793 = vunpack.c.l.b16 %v639
    %v794 = vunpack.c.h.b16 %v639
    %v795 = vunpack.c.l.b16 %v640
    %v796 = vunpack.c.h.b16 %v640
    %v797 = vunpack.c.l.b16 %v641
    %v798 = vunpack.c.h.b16 %v641
    %v799 = vunpack.c.l.b16 %v642
    %v800 = vunpack.c.h.b16 %v642
    %v801 = vunpack.c.l.b16 %v643
    %v802 = vunpack.c.h.b16 %v643
    %v803 = vunpack.c.l.b16 %v644
    %v804 = vunpack.c.h.b16 %v644
    %v805 = vunpack.c.l.b16 %v645
    %v806 = vunpack.c.h.b16 %v645
    %v807 = vunpack.c.l.b16 %v646
    %v808 = vunpack.c.h.b16 %v646
    %v809 = vunpack.c.l.b16 %v647
    %v810 = vunpack.c.h.b16 %v647
    %v811 = vunpack.c.l.b16 %v648
    %v812 = vunpack.c.h.b16 %v648
    %v813 = vunpack.c.l.b16 %v649
    %v814 = vunpack.c.h.b16 %v649
    %v815 = vunpack.c.l.b16 %v650
    %v816 = vunpack.c.h.b16 %v650
    %v817 = vunpack.c.l.b16 %v651
    %v818 = vunpack.c.h.b16 %v651
    %v819 = vunpack.c.l.b16 %v652
    %v820 = vunpack.c.h.b16 %v652
    %v821 = vunpack.c.l.b16 %v653
    %v822 = vunpack.c.h.b16 %v653
    %v823 = vunpack.c.l.b16 %v654
    %v824 = vunpack.c.h.b16 %v654
    %v825 = vunpack.c.l.b16 %v655
    %v826 = vunpack.c.h.b16 %v655
    %v827 = vunpack.c.l.b16 %v656
    %v828 = vunpack.c.h.b16 %v656
    %v829 = vunpack.c.l.b16 %v657
    %v830 = vunpack.c.h.b16 %v657
    %v831 = vunpack.c.l.b16 %v658
    %v832 = vunpack.c.h.b16 %v658
    %v833 = vunpack.c.l.b16 %v659
    %v834 = vunpack.c.h.b16 %v659
    %v835 = vunpack.c.l.b16 %v660
    %v836 = vunpack.c.h.b16 %v660
    %v837 = vunpack.c.l.b16 %v661
    %v838 = vunpack.c.h.b16 %v661
    %v839 = vunpack.c.l.b16 %v662
    %v840 = vunpack.c.h.b16 %v662
    %v841 = vunpack.c.l.b16 %v663
    %v842 = vunpack.c.h.b16 %v663
    %v843 = vunpack.c.l.b16 %v664
    %v844 = vunpack.c.h.b16 %v664
    %v845 = vunpack.c.l.b16 %v665
    %v846 = vunpack.c.h.b16 %v665
    %v847 = vunpack.c.l.b16 %v666
    %v848 = vunpack.c.h.b16 %v666
    %v849 = vunpack.c.l.b16 %v667
    %v850 = vunpack.c.h.b16 %v667
    %v851 = vunpack.c.l.b16 %v668
    %v852 = vunpack.c.h.b16 %v668
    %v853 = vunpack.c.l.b16 %v669
    %v854 = vunpack.c.h.b16 %v669
    %v855 = vunpack.c.l.b16 %v670
    %v856 = vunpack.c.h.b16 %v670
    %v857 = vunpack.c.l.b16 %v671
    %v858 = vunpack.c.h.b16 %v671
    %v859 = vunpack.c.l.b16 %v672
    %v860 = vunpack.c.h.b16 %v672
    %v861 = vunpack.c.l.b16 %v673
    %v862 = vunpack.c.h.b16 %v673
    %v863 = vunpack.c.l.b16 %v674
    %v864 = vunpack.c.h.b16 %v674
    %v865 = vunpack.c.l.b16 %v675
    %v866 = vunpack.c.h.b16 %v675
    %v867 = vunpack.c.l.b16 %v676
    %v868 = vunpack.c.h.b16 %v676
    %v869 = vunpack.c.l.b16 %v677
    %v870 = vunpack.c.h.b16 %v677
    %v871 = vunpack.c.l.b16 %v678
    %v872 = vunpack.c.h.b16 %v678
    %v873 = vunpack.c.l.b16 %v679
    %v874 = vunpack.c.h.b16 %v679
    %v875 = vunpack.c.l.b16 %v680
    %v876 = vunpack.c.h.b16 %v680
    %v877 = vunpack.c.l.b16 %v681
    %v878 = vunpack.c.h.b16 %v681
    %v879 = vunpack.c.l.b16 %v682
    %v880 = vunpack.c.h.b16 %v682
    %v881 = vunpack.c.l.b16 %v683
    %v882 = vunpack.c.h.b16 %v683
    %v883 = vunpack.c.l.b16 %v684
    %v884 = vunpack.c.h.b16 %v684
    %v885 = vunpack.c.l.b16 %v685
    %v886 = vunpack.c.h.b16 %v685
    %v887 = vunpack.c.l.b16 %v686
    %v888 = vunpack.c.h.b16 %v686
    %v889 = vunpack.c.l.b16 %v687
    %v890 = vunpack.c.h.b16 %v687
    %v891 = vunpack.c.l.b16 %v688
    %v892 = vunpack.c.h.b16 %v688
    %v893 = vpack.c.b16 %v767, %v765
    %v894 = vpack.c.b16 %v768, %v766
    %v895 = vpack.c.b16 %v771, %v769
    %v896 = vpack.c.b16 %v772, %v770
    %v897 = vpack.c.b16 %v775, %v773
    %v898 = vpack.c.b16 %v776, %v774
    %v899 = vpack.c.b16 %v779, %v777
    %v900 = vpack.c.b16 %v780, %v778
    %v901 = vpack.c.b16 %v783, %v781
    %v902 = vpack.c.b16 %v784, %v782
    %v903 = vpack.c.b16 %v787, %v785
    %v904 = vpack.c.b16 %v788, %v786
    %v905 = vpack.c.b16 %v791, %v789
    %v906 = vpack.c.b16 %v792, %v790
    %v907 = vpack.c.b16 %v795, %v793
    %v908 = vpack.c.b16 %v796, %v794
    %v909 = vpack.c.b16 %v799, %v797
    %v910 = vpack.c.b16 %v800, %v798
    %v911 = vpack.c.b16 %v803, %v801
    %v912 = vpack.c.b16 %v804, %v802
    %v913 = vpack.c.b16 %v807, %v805
    %v914 = vpack.c.b16 %v808, %v806
    %v915 = vpack.c.b16 %v811, %v809
    %v916 = vpack.c.b16 %v812, %v810
    %v917 = vpack.c.b16 %v815, %v813
    %v918 = vpack.c.b16 %v816, %v814
    %v919 = vpack.c.b16 %v819, %v817
    %v920 = vpack.c.b16 %v820, %v818
    %v921 = vpack.c.b16 %v823, %v821
    %v922 = vpack.c.b16 %v824, %v822
    %v923 = vpack.c.b16 %v827, %v825
    %v924 = vpack.c.b16 %v828, %v826
    %v925 = vpack.c.b16 %v831, %v829
    %v926 = vpack.c.b16 %v832, %v830
    %v927 = vpack.c.b16 %v835, %v833
    %v928 = vpack.c.b16 %v836, %v834
    %v929 = vpack.c.b16 %v839, %v837
    %v930 = vpack.c.b16 %v840, %v838
    %v931 = vpack.c.b16 %v843, %v841
    %v932 = vpack.c.b16 %v844, %v842
    %v933 = vpack.c.b16 %v847, %v845
    %v934 = vpack.c.b16 %v848, %v846
    %v935 = vpack.c.b16 %v851, %v849
    %v936 = vpack.c.b16 %v852, %v850
    %v937 = vpack.c.b16 %v855, %v853
    %v938 = vpack.c.b16 %v856, %v854
    %v939 = vpack.c.b16 %v859, %v857
    %v940 = vpack.c.b16 %v860, %v858
    %v941 = vpack.c.b16 %v863, %v861
    %v942 = vpack.c.b16 %v864, %v862
    %v943 = vpack.c.b16 %v867, %v865
    %v944 = vpack.c.b16 %v868, %v866
    %v945 = vpack.c.b16 %v871, %v869
    %v946 = vpack.c.b16 %v872, %v870
    %v947 = vpack.c.b16 %v875, %v873
    %v948 = vpack.c.b16 %v876, %v874
    %v949 = vpack.c.b16 %v879, %v877
    %v950 = vpack.c.b16 %v880, %v878
    %v951 = vpack.c.b16 %v883, %v881
    %v952 = vpack.c.b16 %v884, %v882
    %v953 = vpack.c.b16 %v887, %v885
    %v954 = vpack.c.b16 %v888, %v886
    %v955 = vpack.c.b16 %v891, %v889
    %v956 = vpack.c.b16 %v892, %v890
    %1021 = vmatprep.subr.bf16.mxu0 %v894
    %1022 = vmatpush1.bf16.msra.mxu0 %v893
    %1023 = vmatprep.subr.bf16.mxu0 %v896
    %1024 = vmatpush1.bf16.msra.mxu0 %v895
    %1025 = vmatprep.subr.bf16.mxu0 %v898
    %1026 = vmatpush1.bf16.msra.mxu0 %v897
    %1027 = vmatprep.subr.bf16.mxu0 %v900
    %1028 = vmatpush1.bf16.msra.mxu0 %v899
    %1029 = vmatprep.subr.bf16.mxu0 %v902
    %1030 = vmatpush1.bf16.msra.mxu0 %v901
    %1031 = vmatprep.subr.bf16.mxu0 %v904
    %1032 = vmatpush1.bf16.msra.mxu0 %v903
    %1033 = vmatprep.subr.bf16.mxu0 %v906
    %1034 = vmatpush1.bf16.msra.mxu0 %v905
    %1035 = vmatprep.subr.bf16.mxu0 %v908
    %1036 = vmatpush1.bf16.msra.mxu0 %v907
    %1037 = vmatprep.subr.bf16.mxu0 %v910
    %1038 = vmatpush1.bf16.msra.mxu0 %v909
    %1039 = vmatprep.subr.bf16.mxu0 %v912
    %1040 = vmatpush1.bf16.msra.mxu0 %v911
    %1041 = vmatprep.subr.bf16.mxu0 %v914
    %1042 = vmatpush1.bf16.msra.mxu0 %v913
    %1043 = vmatprep.subr.bf16.mxu0 %v916
    %1044 = vmatpush1.bf16.msra.mxu0 %v915
    %1045 = vmatprep.subr.bf16.mxu0 %v918
    %1046 = vmatpush1.bf16.msra.mxu0 %v917
    %1047 = vmatprep.subr.bf16.mxu0 %v920
    %1048 = vmatpush1.bf16.msra.mxu0 %v919
    %1049 = vmatprep.subr.bf16.mxu0 %v922
    %1050 = vmatpush1.bf16.msra.mxu0 %v921
    %1051 = vmatprep.subr.bf16.mxu0 %v924
    %1052 = vmatpush1.bf16.msra.mxu0 %v923
    %1053 = vmatprep.mubr.bf16.mxu0 %v594
    %1054 = vmatmul.mubr.bf16.gmra.mrb[0].mxu0 %v593
    %v1055 = vpop.f32.mrb[0].mxu0
    %v1056 = vadd.f32 %v694, %v1055
    %v1057 = vpop.f32.mrb[0].mxu0
    %v1058 = vadd.f32 %v698, %v1057
    %v1059 = vpop.f32.mrb[0].mxu0
    %v1060 = vadd.f32 %v694, %v1059
    %v1061 = vpop.f32.mrb[0].mxu0
    %v1062 = vadd.f32 %v698, %v1061
    %1063 = vmatprep.mubr.bf16.mxu0 %v598
    %1064 = vmatmul.mubr.bf16.gmra.mrb[0].mxu0 %v597
    %v1065 = vpop.f32.mrb[0].mxu0
    %v1066 = vadd.f32 %v694, %v1065
    %v1067 = vpop.f32.mrb[0].mxu0
    %v1068 = vadd.f32 %v698, %v1067
    %v1069 = vpop.f32.mrb[0].mxu0
    %v1070 = vadd.f32 %v694, %v1069
    %v1071 = vpop.f32.mrb[0].mxu0
    %v1072 = vadd.f32 %v698, %v1071
    %1073 = vmatprep.mubr.bf16.mxu0 %v602
    %1074 = vmatmul.mubr.bf16.gmra.mrb[0].mxu0 %v601
    %v1075 = vpop.f32.mrb[0].mxu0
    %v1076 = vadd.f32 %v694, %v1075
    %v1077 = vpop.f32.mrb[0].mxu0
    %v1078 = vadd.f32 %v698, %v1077
    %v1079 = vpop.f32.mrb[0].mxu0
    %v1080 = vadd.f32 %v694, %v1079
    %v1081 = vpop.f32.mrb[0].mxu0
    %v1082 = vadd.f32 %v698, %v1081
    %1083 = vmatprep.mubr.bf16.mxu0 %v606
    %1084 = vmatmul.mubr.bf16.gmra.mrb[0].mxu0 %v605
    %v1085 = vpop.f32.mrb[0].mxu0
    %v1086 = vadd.f32 %v694, %v1085
    %v1087 = vpop.f32.mrb[0].mxu0
    %v1088 = vadd.f32 %v698, %v1087
    %v1089 = vpop.f32.mrb[0].mxu0
    %v1090 = vadd.f32 %v694, %v1089
    %v1091 = vpop.f32.mrb[0].mxu0
    %v1092 = vadd.f32 %v698, %v1091
    %1093 = vmatprep.mubr.bf16.mxu0 %v610
    %1094 = vmatmul.mubr.bf16.gmra.mrb[0].mxu0 %v609
    %v1095 = vpop.f32.mrb[0].mxu0
    %v1096 = vadd.f32 %v694, %v1095
    %v1097 = vpop.f32.mrb[0].mxu0
    %v1098 = vadd.f32 %v698, %v1097
    %v1099 = vpop.f32.mrb[0].mxu0
    %v1100 = vadd.f32 %v694, %v1099
    %v1101 = vpop.f32.mrb[0].mxu0
    %v1102 = vadd.f32 %v698, %v1101
    %1103 = vmatprep.mubr.bf16.mxu0 %v614
    %1104 = vmatmul.mubr.bf16.gmra.mrb[0].mxu0 %v613
    %v1105 = vpop.f32.mrb[0].mxu0
    %v1106 = vadd.f32 %v694, %v1105
    %v1107 = vpop.f32.mrb[0].mxu0
    %v1108 = vadd.f32 %v698, %v1107
    %v1109 = vpop.f32.mrb[0].mxu0
    %v1110 = vadd.f32 %v694, %v1109
    %v1111 = vpop.f32.mrb[0].mxu0
    %v1112 = vadd.f32 %v698, %v1111
    %1113 = vmatprep.mubr.bf16.mxu0 %v618
    %1114 = vmatmul.mubr.bf16.gmra.mrb[0].mxu0 %v617
    %v1115 = vpop.f32.mrb[0].mxu0
    %v1116 = vadd.f32 %v694, %v1115
    %v1117 = vpop.f32.mrb[0].mxu0
    %v1118 = vadd.f32 %v698, %v1117
    %v1119 = vpop.f32.mrb[0].mxu0
    %v1120 = vadd.f32 %v694, %v1119
    %v1121 = vpop.f32.mrb[0].mxu0
    %v1122 = vadd.f32 %v698, %v1121
    %1123 = vmatprep.mubr.bf16.mxu0 %v622
    %1124 = vmatmul.mubr.bf16.gmra.mrb[0].mxu0 %v621
    %v1125 = vpop.f32.mrb[0].mxu0
    %v1126 = vadd.f32 %v694, %v1125
    %v1127 = vpop.f32.mrb[0].mxu0
    %v1128 = vadd.f32 %v698, %v1127
    %v1129 = vpop.f32.mrb[0].mxu0
    %v1130 = vadd.f32 %v694, %v1129
    %v1131 = vpop.f32.mrb[0].mxu0
    %v1132 = vadd.f32 %v698, %v1131
    %1133 = vdwg.mxu0
    %1134 = vmatprep.subr.bf16.mxu0 %v926
    %1135 = vmatpush1.bf16.msra.mxu0 %v925
    %1136 = vmatprep.subr.bf16.mxu0 %v928
    %1137 = vmatpush1.bf16.msra.mxu0 %v927
    %1138 = vmatprep.subr.bf16.mxu0 %v930
    %1139 = vmatpush1.bf16.msra.mxu0 %v929
    %1140 = vmatprep.subr.bf16.mxu0 %v932
    %1141 = vmatpush1.bf16.msra.mxu0 %v931
    %1142 = vmatprep.subr.bf16.mxu0 %v934
    %1143 = vmatpush1.bf16.msra.mxu0 %v933
    %1144 = vmatprep.subr.bf16.mxu0 %v936
    %1145 = vmatpush1.bf16.msra.mxu0 %v935
    %1146 = vmatprep.subr.bf16.mxu0 %v938
    %1147 = vmatpush1.bf16.msra.mxu0 %v937
    %1148 = vmatprep.subr.bf16.mxu0 %v940
    %1149 = vmatpush1.bf16.msra.mxu0 %v939
    %1150 = vmatprep.subr.bf16.mxu0 %v942
    %1151 = vmatpush1.bf16.msra.mxu0 %v941
    %1152 = vmatprep.subr.bf16.mxu0 %v944
    %1153 = vmatpush1.bf16.msra.mxu0 %v943
    %1154 = vmatprep.subr.bf16.mxu0 %v946
    %1155 = vmatpush1.bf16.msra.mxu0 %v945
    %1156 = vmatprep.subr.bf16.mxu0 %v948
    %1157 = vmatpush1.bf16.msra.mxu0 %v947
    %1158 = vmatprep.subr.bf16.mxu0 %v950
    %1159 = vmatpush1.bf16.msra.mxu0 %v949
    %1160 = vmatprep.subr.bf16.mxu0 %v952
    %1161 = vmatpush1.bf16.msra.mxu0 %v951
    %1162 = vmatprep.subr.bf16.mxu0 %v954
    %1163 = vmatpush1.bf16.msra.mxu0 %v953
    %1164 = vmatprep.subr.bf16.mxu0 %v956
    %1165 = vmatpush1.bf16.msra.mxu0 %v955
    %1166 = vmatprep.mubr.bf16.mxu0 %v596
    %1167 = vmatmul.mubr.bf16.gmra.mrb[0].mxu0 %v595
    %v1168 = vpop.f32.mrb[0].mxu0
    %v1169 = vadd.f32 %v1056, %v1168
    %v1170 = vpop.f32.mrb[0].mxu0
    %v1171 = vadd.f32 %v1058, %v1170
    %v1172 = vpop.f32.mrb[0].mxu0
    %v1173 = vadd.f32 %v1060, %v1172
    %v1174 = vpop.f32.mrb[0].mxu0
    %v1175 = vadd.f32 %v1062, %v1174
    %1176 = vmatprep.mubr.bf16.mxu0 %v600
    %1177 = vmatmul.mubr.bf16.gmra.mrb[0].mxu0 %v599
    %v1178 = vpop.f32.mrb[0].mxu0
    %v1179 = vadd.f32 %v1066, %v1178
    %v1180 = vpop.f32.mrb[0].mxu0
    %v1181 = vadd.f32 %v1068, %v1180
    %v1182 = vpop.f32.mrb[0].mxu0
    %v1183 = vadd.f32 %v1070, %v1182
    %v1184 = vpop.f32.mrb[0].mxu0
    %v1185 = vadd.f32 %v1072, %v1184
    %1186 = vmatprep.mubr.bf16.mxu0 %v604
    %1187 = vmatmul.mubr.bf16.gmra.mrb[0].mxu0 %v603
    %v1188 = vpop.f32.mrb[0].mxu0
    %v1189 = vadd.f32 %v1076, %v1188
    %v1190 = vpop.f32.mrb[0].mxu0
    %v1191 = vadd.f32 %v1078, %v1190
    %v1192 = vpop.f32.mrb[0].mxu0
    %v1193 = vadd.f32 %v1080, %v1192
    %v1194 = vpop.f32.mrb[0].mxu0
    %v1195 = vadd.f32 %v1082, %v1194
    %1196 = vmatprep.mubr.bf16.mxu0 %v608
    %1197 = vmatmul.mubr.bf16.gmra.mrb[0].mxu0 %v607
    %v1198 = vpop.f32.mrb[0].mxu0
    %v1199 = vadd.f32 %v1086, %v1198
    %v1200 = vpop.f32.mrb[0].mxu0
    %v1201 = vadd.f32 %v1088, %v1200
    %v1202 = vpop.f32.mrb[0].mxu0
    %v1203 = vadd.f32 %v1090, %v1202
    %v1204 = vpop.f32.mrb[0].mxu0
    %v1205 = vadd.f32 %v1092, %v1204
    %1206 = vmatprep.mubr.bf16.mxu0 %v612
    %1207 = vmatmul.mubr.bf16.gmra.mrb[0].mxu0 %v611
    %v1208 = vpop.f32.mrb[0].mxu0
    %v1209 = vadd.f32 %v1096, %v1208
    %v1210 = vpop.f32.mrb[0].mxu0
    %v1211 = vadd.f32 %v1098, %v1210
    %v1212 = vpop.f32.mrb[0].mxu0
    %v1213 = vadd.f32 %v1100, %v1212
    %v1214 = vpop.f32.mrb[0].mxu0
    %v1215 = vadd.f32 %v1102, %v1214
    %1216 = vmatprep.mubr.bf16.mxu0 %v616
    %1217 = vmatmul.mubr.bf16.gmra.mrb[0].mxu0 %v615
    %v1218 = vpop.f32.mrb[0].mxu0
    %v1219 = vadd.f32 %v1106, %v1218
    %v1220 = vpop.f32.mrb[0].mxu0
    %v1221 = vadd.f32 %v1108, %v1220
    %v1222 = vpop.f32.mrb[0].mxu0
    %v1223 = vadd.f32 %v1110, %v1222
    %v1224 = vpop.f32.mrb[0].mxu0
    %v1225 = vadd.f32 %v1112, %v1224
    %1226 = vmatprep.mubr.bf16.mxu0 %v620
    %1227 = vmatmul.mubr.bf16.gmra.mrb[0].mxu0 %v619
    %v1228 = vpop.f32.mrb[0].mxu0
    %v1229 = vadd.f32 %v1116, %v1228
    %v1230 = vpop.f32.mrb[0].mxu0
    %v1231 = vadd.f32 %v1118, %v1230
    %v1232 = vpop.f32.mrb[0].mxu0
    %v1233 = vadd.f32 %v1120, %v1232
    %v1234 = vpop.f32.mrb[0].mxu0
    %v1235 = vadd.f32 %v1122, %v1234
    %1236 = vmatprep.mubr.bf16.mxu0 %v624
    %1237 = vmatmul.mubr.bf16.gmra.mrb[0].mxu0 %v623
    %v1238 = vpop.f32.mrb[0].mxu0
    %v1239 = vadd.f32 %v1126, %v1238
    %v1240 = vpop.f32.mrb[0].mxu0
    %v1241 = vadd.f32 %v1128, %v1240
    %v1242 = vpop.f32.mrb[0].mxu0
    %v1243 = vadd.f32 %v1130, %v1242
    %v1244 = vpop.f32.mrb[0].mxu0
    %v1245 = vadd.f32 %v1132, %v1244
    %1246 = vdwg.mxu0
    %vm1247 = vcmp.gt.f32.partialorder %v1169, 0.0
    %vm1248 = vcmp.gt.f32.partialorder %v1171, 0.0
    %vm1249 = vcmp.gt.f32.partialorder %v1173, 0.0
    %vm1250 = vcmp.gt.f32.partialorder %v1175, 0.0
    %vm1251 = vcmp.gt.f32.partialorder %v1179, 0.0
    %vm1252 = vcmp.gt.f32.partialorder %v1181, 0.0
    %vm1253 = vcmp.gt.f32.partialorder %v1183, 0.0
    %vm1254 = vcmp.gt.f32.partialorder %v1185, 0.0
    %vm1255 = vcmp.gt.f32.partialorder %v1189, 0.0
    %vm1256 = vcmp.gt.f32.partialorder %v1191, 0.0
    %vm1257 = vcmp.gt.f32.partialorder %v1193, 0.0
    %vm1258 = vcmp.gt.f32.partialorder %v1195, 0.0
    %vm1259 = vcmp.gt.f32.partialorder %v1199, 0.0
    %vm1260 = vcmp.gt.f32.partialorder %v1201, 0.0
    %vm1261 = vcmp.gt.f32.partialorder %v1203, 0.0
    %vm1262 = vcmp.gt.f32.partialorder %v1205, 0.0
    %vm1263 = vcmp.gt.f32.partialorder %v1209, 0.0
    %vm1264 = vcmp.gt.f32.partialorder %v1211, 0.0
    %vm1265 = vcmp.gt.f32.partialorder %v1213, 0.0
    %vm1266 = vcmp.gt.f32.partialorder %v1215, 0.0
    %vm1267 = vcmp.gt.f32.partialorder %v1219, 0.0
    %vm1268 = vcmp.gt.f32.partialorder %v1221, 0.0
    %vm1269 = vcmp.gt.f32.partialorder %v1223, 0.0
    %vm1270 = vcmp.gt.f32.partialorder %v1225, 0.0
    %vm1271 = vcmp.gt.f32.partialorder %v1229, 0.0
    %vm1272 = vcmp.gt.f32.partialorder %v1231, 0.0
    %vm1273 = vcmp.gt.f32.partialorder %v1233, 0.0
    %vm1274 = vcmp.gt.f32.partialorder %v1235, 0.0
    %vm1275 = vcmp.gt.f32.partialorder %v1239, 0.0
    %vm1276 = vcmp.gt.f32.partialorder %v1241, 0.0
    %vm1277 = vcmp.gt.f32.partialorder %v1243, 0.0
    %vm1278 = vcmp.gt.f32.partialorder %v1245, 0.0
    %v1279 = vmul.f32 %v1169, 0.2
    %v1280 = vmul.f32 %v1171, 0.2
    %v1281 = vmul.f32 %v1173, 0.2
    %v1282 = vmul.f32 %v1175, 0.2
    %v1283 = vmul.f32 %v1179, 0.2
    %v1284 = vmul.f32 %v1181, 0.2
    %v1285 = vmul.f32 %v1183, 0.2
    %v1286 = vmul.f32 %v1185, 0.2
    %v1287 = vmul.f32 %v1189, 0.2
    %v1288 = vmul.f32 %v1191, 0.2
    %v1289 = vmul.f32 %v1193, 0.2
    %v1290 = vmul.f32 %v1195, 0.2
    %v1291 = vmul.f32 %v1199, 0.2
    %v1292 = vmul.f32 %v1201, 0.2
    %v1293 = vmul.f32 %v1203, 0.2
    %v1294 = vmul.f32 %v1205, 0.2
    %v1295 = vmul.f32 %v1209, 0.2
    %v1296 = vmul.f32 %v1211, 0.2
    %v1297 = vmul.f32 %v1213, 0.2
    %v1298 = vmul.f32 %v1215, 0.2
    %v1299 = vmul.f32 %v1219, 0.2
    %v1300 = vmul.f32 %v1221, 0.2
    %v1301 = vmul.f32 %v1223, 0.2
    %v1302 = vmul.f32 %v1225, 0.2
    %v1303 = vmul.f32 %v1229, 0.2
    %v1304 = vmul.f32 %v1231, 0.2
    %v1305 = vmul.f32 %v1233, 0.2
    %v1306 = vmul.f32 %v1235, 0.2
    %v1307 = vmul.f32 %v1239, 0.2
    %v1308 = vmul.f32 %v1241, 0.2
    %v1309 = vmul.f32 %v1243, 0.2
    %v1310 = vmul.f32 %v1245, 0.2
    %v1311 = vsel %vm1247, %v1169, %v1279
    %v1312 = vsel %vm1248, %v1171, %v1280
    %v1313 = vsel %vm1249, %v1173, %v1281
    %v1314 = vsel %vm1250, %v1175, %v1282
    %v1315 = vsel %vm1251, %v1179, %v1283
    %v1316 = vsel %vm1252, %v1181, %v1284
    %v1317 = vsel %vm1253, %v1183, %v1285
    %v1318 = vsel %vm1254, %v1185, %v1286
    %v1319 = vsel %vm1255, %v1189, %v1287
    %v1320 = vsel %vm1256, %v1191, %v1288
    %v1321 = vsel %vm1257, %v1193, %v1289
    %v1322 = vsel %vm1258, %v1195, %v1290
    %v1323 = vsel %vm1259, %v1199, %v1291
    %v1324 = vsel %vm1260, %v1201, %v1292
    %v1325 = vsel %vm1261, %v1203, %v1293
    %v1326 = vsel %vm1262, %v1205, %v1294
    %v1327 = vsel %vm1263, %v1209, %v1295
    %v1328 = vsel %vm1264, %v1211, %v1296
    %v1329 = vsel %vm1265, %v1213, %v1297
    %v1330 = vsel %vm1266, %v1215, %v1298
    %v1331 = vsel %vm1267, %v1219, %v1299
    %v1332 = vsel %vm1268, %v1221, %v1300
    %v1333 = vsel %vm1269, %v1223, %v1301
    %v1334 = vsel %vm1270, %v1225, %v1302
    %v1335 = vsel %vm1271, %v1229, %v1303
    %v1336 = vsel %vm1272, %v1231, %v1304
    %v1337 = vsel %vm1273, %v1233, %v1305
    %v1338 = vsel %vm1274, %v1235, %v1306
    %v1339 = vsel %vm1275, %v1239, %v1307
    %v1340 = vsel %vm1276, %v1241, %v1308
    %v1341 = vsel %vm1277, %v1243, %v1309
    %v1342 = vsel %vm1278, %v1245, %v1310
    %v1343 = vpack.c.bf16 %v1313, %v1311
    %v1344 = vpack.c.bf16 %v1314, %v1312
    %v1345 = vpack.c.bf16 %v1317, %v1315
    %v1346 = vpack.c.bf16 %v1318, %v1316
    %v1347 = vpack.c.bf16 %v1321, %v1319
    %v1348 = vpack.c.bf16 %v1322, %v1320
    %v1349 = vpack.c.bf16 %v1325, %v1323
    %v1350 = vpack.c.bf16 %v1326, %v1324
    %v1351 = vpack.c.bf16 %v1329, %v1327
    %v1352 = vpack.c.bf16 %v1330, %v1328
    %v1353 = vpack.c.bf16 %v1333, %v1331
    %v1354 = vpack.c.bf16 %v1334, %v1332
    %v1355 = vpack.c.bf16 %v1337, %v1335
    %v1356 = vpack.c.bf16 %v1338, %v1336
    %v1357 = vpack.c.bf16 %v1341, %v1339
    %v1358 = vpack.c.bf16 %v1342, %v1340
    %v1359 = vld [vmem:[%s5] sm:$0xf]
    %v1360 = vld [vmem:[%s5 + $0x4] sm:$0xf]
    %v1361 = vld [vmem:[%s5 + $0x8] sm:$0xf]
    %v1362 = vld [vmem:[%s5 + $0xc] sm:$0xf]
    %v1363 = vld [vmem:[%s5 + $0x10] sm:$0xf]
    %v1364 = vld [vmem:[%s5 + $0x14] sm:$0xf]
    %v1365 = vld [vmem:[%s5 + $0x18] sm:$0xf]
    %v1366 = vld [vmem:[%s5 + $0x1c] sm:$0xf]
    %v1367 = vld [vmem:[%s5 + $0x20] sm:$0xf]
    %v1368 = vld [vmem:[%s5 + $0x24] sm:$0xf]
    %v1369 = vld [vmem:[%s5 + $0x28] sm:$0xf]
    %v1370 = vld [vmem:[%s5 + $0x2c] sm:$0xf]
    %v1371 = vld [vmem:[%s5 + $0x30] sm:$0xf]
    %v1372 = vld [vmem:[%s5 + $0x34] sm:$0xf]
    %v1373 = vld [vmem:[%s5 + $0x38] sm:$0xf]
    %v1374 = vld [vmem:[%s5 + $0x3c] sm:$0xf]
    %v1375 = vld [vmem:[%s5 + $0x40] sm:$0xf]
    %v1376 = vld [vmem:[%s5 + $0x44] sm:$0xf]
    %v1377 = vld [vmem:[%s5 + $0x48] sm:$0xf]
    %v1378 = vld [vmem:[%s5 + $0x4c] sm:$0xf]
    %v1379 = vld [vmem:[%s5 + $0x50] sm:$0xf]
    %v1380 = vld [vmem:[%s5 + $0x54] sm:$0xf]
    %v1381 = vld [vmem:[%s5 + $0x58] sm:$0xf]
    %v1382 = vld [vmem:[%s5 + $0x5c] sm:$0xf]
    %v1383 = vld [vmem:[%s5 + $0x60] sm:$0xf]
    %v1384 = vld [vmem:[%s5 + $0x64] sm:$0xf]
    %v1385 = vld [vmem:[%s5 + $0x68] sm:$0xf]
    %v1386 = vld [vmem:[%s5 + $0x6c] sm:$0xf]
    %v1387 = vld [vmem:[%s5 + $0x70] sm:$0xf]
    %v1388 = vld [vmem:[%s5 + $0x74] sm:$0xf]
    %v1389 = vld [vmem:[%s5 + $0x78] sm:$0xf]
    %v1390 = vld [vmem:[%s5 + $0x7c] sm:$0xf]
    %v1391 = vld [vmem:[%s6] sm:$0x1]
    %v1393 = vlaneseq
    %v1394 = vshrl.u32 %v1393, 7
    %v1395 = vsub.s32 0, %v1394
    %v1396 = vrot.slane %v1391, %v1395
    %v1430 = vunpack.c.l.b16 %v1359
    %v1431 = vunpack.c.l.b16 %v1360
    %v1432 = vunpack.c.l.b16 %v1361
    %v1433 = vunpack.c.l.b16 %v1362
    %v1434 = vunpack.c.l.b16 %v1363
    %v1435 = vunpack.c.l.b16 %v1364
    %v1436 = vunpack.c.l.b16 %v1365
    %v1437 = vunpack.c.l.b16 %v1366
    %v1438 = vunpack.c.l.b16 %v1367
    %v1439 = vunpack.c.l.b16 %v1368
    %v1440 = vunpack.c.l.b16 %v1369
    %v1441 = vunpack.c.l.b16 %v1370
    %v1442 = vunpack.c.l.b16 %v1371
    %v1443 = vunpack.c.l.b16 %v1372
    %v1444 = vunpack.c.l.b16 %v1373
    %v1445 = vunpack.c.l.b16 %v1374
    %v1446 = vunpack.c.l.b16 %v1375
    %v1447 = vunpack.c.l.b16 %v1376
    %v1448 = vunpack.c.l.b16 %v1377
    %v1449 = vunpack.c.l.b16 %v1378
    %v1450 = vunpack.c.l.b16 %v1379
    %v1451 = vunpack.c.l.b16 %v1380
    %v1452 = vunpack.c.l.b16 %v1381
    %v1453 = vunpack.c.l.b16 %v1382
    %v1454 = vunpack.c.l.b16 %v1383
    %v1455 = vunpack.c.l.b16 %v1384
    %v1456 = vunpack.c.l.b16 %v1385
    %v1457 = vunpack.c.l.b16 %v1386
    %v1458 = vunpack.c.l.b16 %v1387
    %v1459 = vunpack.c.l.b16 %v1388
    %v1460 = vunpack.c.l.b16 %v1389
    %v1461 = vunpack.c.l.b16 %v1390
    %v1462 = vpack.c.b16 %v1431, %v1430
    %v1463 = vpack.c.b16 %v1433, %v1432
    %v1464 = vpack.c.b16 %v1435, %v1434
    %v1465 = vpack.c.b16 %v1437, %v1436
    %v1466 = vpack.c.b16 %v1439, %v1438
    %v1467 = vpack.c.b16 %v1441, %v1440
    %v1468 = vpack.c.b16 %v1443, %v1442
    %v1469 = vpack.c.b16 %v1445, %v1444
    %v1470 = vpack.c.b16 %v1447, %v1446
    %v1471 = vpack.c.b16 %v1449, %v1448
    %v1472 = vpack.c.b16 %v1451, %v1450
    %v1473 = vpack.c.b16 %v1453, %v1452
    %v1474 = vpack.c.b16 %v1455, %v1454
    %v1475 = vpack.c.b16 %v1457, %v1456
    %v1476 = vpack.c.b16 %v1459, %v1458
    %v1477 = vpack.c.b16 %v1461, %v1460
    %1494 = vmatprep.subr.bf16.mxu0 0
    %1495 = vmatpush1.bf16.msra.mxu0 %v1462
    %1496 = vmatprep.subr.bf16.mxu0 0
    %1497 = vmatpush1.bf16.msra.mxu0 %v1463
    %1498 = vmatprep.subr.bf16.mxu0 0
    %1499 = vmatpush1.bf16.msra.mxu0 %v1464
    %1500 = vmatprep.subr.bf16.mxu0 0
    %1501 = vmatpush1.bf16.msra.mxu0 %v1465
    %1502 = vmatprep.subr.bf16.mxu0 0
    %1503 = vmatpush1.bf16.msra.mxu0 %v1466
    %1504 = vmatprep.subr.bf16.mxu0 0
    %1505 = vmatpush1.bf16.msra.mxu0 %v1467
    %1506 = vmatprep.subr.bf16.mxu0 0
    %1507 = vmatpush1.bf16.msra.mxu0 %v1468
    %1508 = vmatprep.subr.bf16.mxu0 0
    %1509 = vmatpush1.bf16.msra.mxu0 %v1469
    %1510 = vmatprep.subr.bf16.mxu0 0
    %1511 = vmatpush1.bf16.msra.mxu0 %v1470
    %1512 = vmatprep.subr.bf16.mxu0 0
    %1513 = vmatpush1.bf16.msra.mxu0 %v1471
    %1514 = vmatprep.subr.bf16.mxu0 0
    %1515 = vmatpush1.bf16.msra.mxu0 %v1472
    %1516 = vmatprep.subr.bf16.mxu0 0
    %1517 = vmatpush1.bf16.msra.mxu0 %v1473
    %1518 = vmatprep.subr.bf16.mxu0 0
    %1519 = vmatpush1.bf16.msra.mxu0 %v1474
    %1520 = vmatprep.subr.bf16.mxu0 0
    %1521 = vmatpush1.bf16.msra.mxu0 %v1475
    %1522 = vmatprep.subr.bf16.mxu0 0
    %1523 = vmatpush1.bf16.msra.mxu0 %v1476
    %1524 = vmatprep.subr.bf16.mxu0 0
    %1525 = vmatpush1.bf16.msra.mxu0 %v1477
    %1526 = vmatprep.mubr.bf16.mxu0 %v1344
    %1527 = vmatmul.mubr.bf16.gmra.mrb[0].mxu0 %v1343
    %v1528 = vpop.f32.mrb[0].mxu0
    %v1529 = vadd.f32 %v1396, %v1528
    %v1530 = vpop.f32.mrb[0].mxu0
    %v1531 = vpop.f32.mrb[0].mxu0
    %v1532 = vadd.f32 %v1396, %v1531
    %v1533 = vpop.f32.mrb[0].mxu0
    %1534 = vmatprep.mubr.bf16.mxu0 %v1346
    %1535 = vmatmul.mubr.bf16.gmra.mrb[0].mxu0 %v1345
    %v1536 = vpop.f32.mrb[0].mxu0
    %v1537 = vadd.f32 %v1396, %v1536
    %v1538 = vpop.f32.mrb[0].mxu0
    %v1539 = vpop.f32.mrb[0].mxu0
    %v1540 = vadd.f32 %v1396, %v1539
    %v1541 = vpop.f32.mrb[0].mxu0
    %1542 = vmatprep.mubr.bf16.mxu0 %v1348
    %1543 = vmatmul.mubr.bf16.gmra.mrb[0].mxu0 %v1347
    %v1544 = vpop.f32.mrb[0].mxu0
    %v1545 = vadd.f32 %v1396, %v1544
    %v1546 = vpop.f32.mrb[0].mxu0
    %v1547 = vpop.f32.mrb[0].mxu0
    %v1548 = vadd.f32 %v1396, %v1547
    %v1549 = vpop.f32.mrb[0].mxu0
    %1550 = vmatprep.mubr.bf16.mxu0 %v1350
    %1551 = vmatmul.mubr.bf16.gmra.mrb[0].mxu0 %v1349
    %v1552 = vpop.f32.mrb[0].mxu0
    %v1553 = vadd.f32 %v1396, %v1552
    %v1554 = vpop.f32.mrb[0].mxu0
    %v1555 = vpop.f32.mrb[0].mxu0
    %v1556 = vadd.f32 %v1396, %v1555
    %v1557 = vpop.f32.mrb[0].mxu0
    %1558 = vmatprep.mubr.bf16.mxu0 %v1352
    %1559 = vmatmul.mubr.bf16.gmra.mrb[0].mxu0 %v1351
    %v1560 = vpop.f32.mrb[0].mxu0
    %v1561 = vadd.f32 %v1396, %v1560
    %v1562 = vpop.f32.mrb[0].mxu0
    %v1563 = vpop.f32.mrb[0].mxu0
    %v1564 = vadd.f32 %v1396, %v1563
    %v1565 = vpop.f32.mrb[0].mxu0
    %1566 = vmatprep.mubr.bf16.mxu0 %v1354
    %1567 = vmatmul.mubr.bf16.gmra.mrb[0].mxu0 %v1353
    %v1568 = vpop.f32.mrb[0].mxu0
    %v1569 = vadd.f32 %v1396, %v1568
    %v1570 = vpop.f32.mrb[0].mxu0
    %v1571 = vpop.f32.mrb[0].mxu0
    %v1572 = vadd.f32 %v1396, %v1571
    %v1573 = vpop.f32.mrb[0].mxu0
    %1574 = vmatprep.mubr.bf16.mxu0 %v1356
    %1575 = vmatmul.mubr.bf16.gmra.mrb[0].mxu0 %v1355
    %v1576 = vpop.f32.mrb[0].mxu0
    %v1577 = vadd.f32 %v1396, %v1576
    %v1578 = vpop.f32.mrb[0].mxu0
    %v1579 = vpop.f32.mrb[0].mxu0
    %v1580 = vadd.f32 %v1396, %v1579
    %v1581 = vpop.f32.mrb[0].mxu0
    %1582 = vmatprep.mubr.bf16.mxu0 %v1358
    %1583 = vmatmul.mubr.bf16.gmra.mrb[0].mxu0 %v1357
    %v1584 = vpop.f32.mrb[0].mxu0
    %v1585 = vadd.f32 %v1396, %v1584
    %v1586 = vpop.f32.mrb[0].mxu0
    %v1587 = vpop.f32.mrb[0].mxu0
    %v1588 = vadd.f32 %v1396, %v1587
    %v1589 = vpop.f32.mrb[0].mxu0
    %1590 = vdwg.mxu0
    %v1591 = vxor.u32 %v1529, 2147483648
    %v1592 = vxor.u32 %v1532, 2147483648
    %v1593 = vxor.u32 %v1537, 2147483648
    %v1594 = vxor.u32 %v1540, 2147483648
    %v1595 = vxor.u32 %v1545, 2147483648
    %v1596 = vxor.u32 %v1548, 2147483648
    %v1597 = vxor.u32 %v1553, 2147483648
    %v1598 = vxor.u32 %v1556, 2147483648
    %v1599 = vxor.u32 %v1561, 2147483648
    %v1600 = vxor.u32 %v1564, 2147483648
    %v1601 = vxor.u32 %v1569, 2147483648
    %v1602 = vxor.u32 %v1572, 2147483648
    %v1603 = vxor.u32 %v1577, 2147483648
    %v1604 = vxor.u32 %v1580, 2147483648
    %v1605 = vxor.u32 %v1585, 2147483648
    %v1606 = vxor.u32 %v1588, 2147483648
    %v1607 = vmul.f32 %v1591, 1.442695
    %v1608 = vpow.pop %v1607
    %v1609 = vmul.f32 %v1592, 1.442695
    %v1610 = vpow.pop %v1609
    %v1611 = vmul.f32 %v1593, 1.442695
    %v1612 = vpow.pop %v1611
    %v1613 = vmul.f32 %v1594, 1.442695
    %v1614 = vpow.pop %v1613
    %v1615 = vmul.f32 %v1595, 1.442695
    %v1616 = vpow.pop %v1615
    %v1617 = vmul.f32 %v1596, 1.442695
    %v1618 = vpow.pop %v1617
    %v1619 = vmul.f32 %v1597, 1.442695
    %v1620 = vpow.pop %v1619
    %v1621 = vmul.f32 %v1598, 1.442695
    %v1622 = vpow.pop %v1621
    %v1623 = vmul.f32 %v1599, 1.442695
    %v1624 = vpow.pop %v1623
    %v1625 = vmul.f32 %v1600, 1.442695
    %v1626 = vpow.pop %v1625
    %v1627 = vmul.f32 %v1601, 1.442695
    %v1628 = vpow.pop %v1627
    %v1629 = vmul.f32 %v1602, 1.442695
    %v1630 = vpow.pop %v1629
    %v1631 = vmul.f32 %v1603, 1.442695
    %v1632 = vpow.pop %v1631
    %v1633 = vmul.f32 %v1604, 1.442695
    %v1634 = vpow.pop %v1633
    %v1635 = vmul.f32 %v1605, 1.442695
    %v1636 = vpow.pop %v1635
    %v1637 = vmul.f32 %v1606, 1.442695
    %v1638 = vpow.pop %v1637
    %v1639 = vadd.f32 %v1608, 1.0
    %v1640 = vadd.f32 %v1610, 1.0
    %v1641 = vadd.f32 %v1612, 1.0
    %v1642 = vadd.f32 %v1614, 1.0
    %v1643 = vadd.f32 %v1616, 1.0
    %v1644 = vadd.f32 %v1618, 1.0
    %v1645 = vadd.f32 %v1620, 1.0
    %v1646 = vadd.f32 %v1622, 1.0
    %v1647 = vadd.f32 %v1624, 1.0
    %v1648 = vadd.f32 %v1626, 1.0
    %v1649 = vadd.f32 %v1628, 1.0
    %v1650 = vadd.f32 %v1630, 1.0
    %v1651 = vadd.f32 %v1632, 1.0
    %v1652 = vadd.f32 %v1634, 1.0
    %v1653 = vadd.f32 %v1636, 1.0
    %v1654 = vadd.f32 %v1638, 1.0
    %v1655 = vrcp.pop %v1639
    %v1656 = vmul.f32 1.0, %v1655
    %v1657 = vrcp.pop %v1640
    %v1658 = vmul.f32 1.0, %v1657
    %v1659 = vrcp.pop %v1641
    %v1660 = vmul.f32 1.0, %v1659
    %v1661 = vrcp.pop %v1642
    %v1662 = vmul.f32 1.0, %v1661
    %v1663 = vrcp.pop %v1643
    %v1664 = vmul.f32 1.0, %v1663
    %v1665 = vrcp.pop %v1644
    %v1666 = vmul.f32 1.0, %v1665
    %v1667 = vrcp.pop %v1645
    %v1668 = vmul.f32 1.0, %v1667
    %v1669 = vrcp.pop %v1646
    %v1670 = vmul.f32 1.0, %v1669
    %v1671 = vrcp.pop %v1647
    %v1672 = vmul.f32 1.0, %v1671
    %v1673 = vrcp.pop %v1648
    %v1674 = vmul.f32 1.0, %v1673
    %v1675 = vrcp.pop %v1649
    %v1676 = vmul.f32 1.0, %v1675
    %v1677 = vrcp.pop %v1650
    %v1678 = vmul.f32 1.0, %v1677
    %v1679 = vrcp.pop %v1651
    %v1680 = vmul.f32 1.0, %v1679
    %v1681 = vrcp.pop %v1652
    %v1682 = vmul.f32 1.0, %v1681
    %v1683 = vrcp.pop %v1653
    %v1684 = vmul.f32 1.0, %v1683
    %v1685 = vrcp.pop %v1654
    %v1686 = vmul.f32 1.0, %v1685
    %1687 = vst [vmem:[#allocation7] sm:$0xff] %v1656
    %1688 = vst [vmem:[#allocation7 + $0x8] sm:$0xff] %v1658
    %1689 = vst [vmem:[#allocation7 + $0x10] sm:$0xff] %v1660
    %1690 = vst [vmem:[#allocation7 + $0x18] sm:$0xff] %v1662
    %1691 = vst [vmem:[#allocation7 + $0x20] sm:$0xff] %v1664
    %1692 = vst [vmem:[#allocation7 + $0x28] sm:$0xff] %v1666
    %1693 = vst [vmem:[#allocation7 + $0x30] sm:$0xff] %v1668
    %1694 = vst [vmem:[#allocation7 + $0x38] sm:$0xff] %v1670
    %1695 = vst [vmem:[#allocation7 + $0x40] sm:$0xff] %v1672
    %1696 = vst [vmem:[#allocation7 + $0x48] sm:$0xff] %v1674
    %1697 = vst [vmem:[#allocation7 + $0x50] sm:$0xff] %v1676
    %1698 = vst [vmem:[#allocation7 + $0x58] sm:$0xff] %v1678
    %1699 = vst [vmem:[#allocation7 + $0x60] sm:$0xff] %v1680
    %1700 = vst [vmem:[#allocation7 + $0x68] sm:$0xff] %v1682
    %1701 = vst [vmem:[#allocation7 + $0x70] sm:$0xff] %v1684
    %1702 = vst [vmem:[#allocation7 + $0x78] sm:$0xff] %v1686
    // Predicated region
    $region38: #{tpu_custom_call.1} parent=1 // pred_check
      _
    $region39: #{tpu_custom_call.1} parent=1 // pred_check_branch
      %1704 = sbr.rel (0) target = $region41
    $region40: #{tpu_custom_call.1} parent=1 // pred_region
      %s1706 = ssub.s32 2048, 2048
      %1707 = vsyncadd [#allocation4], %s1706
      %s1708 = sshll.u32 [#allocation7], 4
      %s1709 = int_to_ptr.vmem [resolvable:$true] %s1708
      %1714 = dma.vmem_to_hbm [thread:$0]  %s1709, 2048, %s7, [#allocation4], 128, 128, 8
    $region41: #{tpu_custom_call.1} parent=1 // pred_fallthru
      _
    // Predicated region
    $region42: #{tpu_custom_call.1} parent=1 // pred_check
      _
    $region43: #{tpu_custom_call.1} parent=1 // pred_check_branch
      %1716 = sbr.rel (0) target = $region45
    $region44: #{tpu_custom_call.1} parent=1 // pred_region
      %1717 = dma.done [#allocation4], 2048
    $region45: #{tpu_custom_call.1} parent=1 // pred_fallthru
      _
    %1718 = vsyncpa [#allocation3], 1
    %1719 = vsyncpa [#allocation6], 1
    %1720 = vsyncpa [#allocation4], 1

</llo_original>
